<compile_context>
chip_gen: v6e
topology: v6e:2x2x1
jax: 0.10.0
libtpu: 0.0.40
codegen_flags: <defaults>
</compile_context>

<pallas_src>
import jax
import jax.numpy as jnp
from jax import lax
from jax.experimental import pallas as pl
from jax.experimental.pallas import tpu as pltpu

KERNEL_SIZE = 3
NUM_LEVELS = 3                    # dilations 1, 2, 4 (2**i)
MAXPAD = 2 ** (NUM_LEVELS - 1)    # largest dilation -> per-sequence pad width
LEAD = 8                          # sublane-aligned leading margin (f32: 8 rows)


def cnn_kernel(x_ref, vmask_ref, pool_ref,
               w1ads_ref, b1ads_ref, wslab_ref, bslab_ref,
               fcw_ref, fcb_ref,
               out_ref, hbuf):
    CORE = vmask_ref.shape[0]          # B * (L + 2*MAXPAD) rows folded into M
    R, F = hbuf.shape
    TRAIL = R - LEAD - CORE
    core = pl.ds(LEAD, CORE)           # sublane-aligned core window
    vmask = vmask_ref[...]             # (CORE, 1): 1 on real seq rows, 0 on pad rows

    def conv(src_ref, d, w, b):
        # im2col: 3 shifted core windows concatenated along the lane axis,
        # then a single MXU matmul against the pre-flattened (K*Cin, Cout) weight.
        taps = [src_ref[pl.ds(LEAD + (k - 1) * d, CORE), :]
                for k in range(KERNEL_SIZE)]
        xk = jnp.concatenate(taps, axis=1)                       # (CORE, K*Cin)
        return jnp.dot(xk, w, preferred_element_type=jnp.float32) + b

    def wb(i):
        return wslab_ref[i], bslab_ref[pl.ds(i, 1), :]

    # Zero only the margin rows of the persistent scratch; the CORE window is
    # fully overwritten (mask-zeroed) before it is ever read.
    hbuf[pl.ds(0, LEAD), :] = jnp.zeros((LEAD, F), jnp.float32)
    hbuf[pl.ds(LEAD + CORE, TRAIL), :] = jnp.zeros((TRAIL, F), jnp.float32)

    # ---- block 1 (dilation 1): conv1a and the 1x1 downsample fused in ONE matmul ----
    taps = [x_ref[pl.ds(LEAD + (k - 1), CORE), :] for k in range(KERNEL_SIZE)]
    xk = jnp.concatenate(taps, axis=1)                           # (CORE, K*Cin)
    z = jnp.dot(xk, w1ads_ref[...],
                preferred_element_type=jnp.float32) + b1ads_ref[...]   # (CORE, 2F)
    h = jnp.maximum(z[:, :F], 0.0) * vmask                       # conv1a pre-act
    hbuf[core, :] = h
    w, b = wb(0)
    h = jnp.maximum(conv(hbuf, 1, w, b), 0.0)
    y = jnp.maximum(h + z[:, F:], 0.0) * vmask                   # res = 1x1 downsample
    hbuf[core, :] = y

    # ---- block 2 (dilation 2, identity residual) ----
    w, b = wb(1)
    h = jnp.maximum(conv(hbuf, 2, w, b), 0.0) * vmask
    hbuf[core, :] = h
    w, b = wb(2)
    h = jnp.maximum(conv(hbuf, 2, w, b), 0.0)
    y = jnp.maximum(h + y, 0.0) * vmask
    hbuf[core, :] = y

    # ---- block 3 (dilation 4, identity residual) ----
    w, b = wb(3)
    h = jnp.maximum(conv(hbuf, 4, w, b), 0.0) * vmask
    hbuf[core, :] = h
    w, b = wb(4)
    h = jnp.maximum(conv(hbuf, 4, w, b), 0.0)
    y = jnp.maximum(h + y, 0.0)        # pad/over-length rows are zeroed by the pool matrix

    # ---- masked mean pool + FC as two tiny matmuls; single (B, num_classes) store ----
    pooled = jnp.dot(pool_ref[...], y, preferred_element_type=jnp.float32)   # (B, F)
    out_ref[...] = jnp.dot(pooled, fcw_ref[...],
                           preferred_element_type=jnp.float32) + fcb_ref[...]


def cnn_forward(x, lengths, params):
    B, L, Cin = x.shape
    F = params["b1_b1"].shape[-1]
    C = params["fc_b"].shape[-1]
    K = KERNEL_SIZE
    L_pad = L + 2 * MAXPAD
    CORE = B * L_pad
    R = ((LEAD + CORE + MAXPAD + 7) // 8) * 8       # scratch rows (8-aligned, trailing >= MAXPAD)

    # Fold batch into the M dimension with per-sequence zero pad rows (layout
    # plumbing done once in the wrapper); LEAD-aligned leading margin.
    xp = jnp.pad(x.astype(jnp.float32), ((0, 0), (MAXPAD, MAXPAD), (0, 0)))
    xp = xp.reshape(CORE, Cin)
    xp = jnp.pad(xp, ((LEAD, R - CORE - LEAD), (0, 0)))          # (R, Cin)

    # 1 on real sequence rows, 0 on pad rows (static given B, L).
    offs = jnp.arange(CORE) % L_pad
    vmask = ((offs >= MAXPAD) & (offs < MAXPAD + L)
             ).astype(jnp.float32)[:, None]                      # (CORE, 1)

    # Pooling matrix: pool[b, t] = 1/len_b on rows of batch b with seq idx < len_b.
    # (Uses 1/max(len,1): differs from the reference only for len==0.)
    t = jnp.arange(CORE)
    blk = t // L_pad
    off = t % L_pad - MAXPAD
    lens_f = lengths.astype(jnp.float32)
    sel = ((blk[None, :] == jnp.arange(B)[:, None])
           & (off[None, :] >= 0) & (off[None, :] < L)
           & (off[None, :] < lengths[:, None]))
    pool = jnp.where(sel, 1.0 / jnp.maximum(lens_f, 1.0)[:, None],
                     0.0).astype(jnp.float32)                    # (B, CORE)

    def flat(w):     # (K, Cin, Cout) -> (K*Cin, Cout), matches lane-concat order
        return w.reshape(w.shape[0] * w.shape[1], w.shape[2])

    # Fused block-1 conv1a + 1x1 downsample: dsw embedded in the center-tap rows.
    w1a = flat(params["b1_w1"])                                  # (K*Cin, F)
    ds_embed = jnp.zeros((K * Cin, F), jnp.float32
                         ).at[Cin:2 * Cin, :].set(params["b1_dsw"])
    w1ads = jnp.concatenate([w1a, ds_embed], axis=1)             # (K*Cin, 2F)
    b1ads = jnp.concatenate([params["b1_b1"], params["b1_dsb"]], axis=1)   # (1, 2F)

    # Pack the remaining conv weights/biases into two slabs (fewer DMAs, less padding).
    wslab = jnp.stack([flat(params["b1_w2"]), flat(params["b2_w1"]),
                       flat(params["b2_w2"]), flat(params["b3_w1"]),
                       flat(params["b3_w2"])], axis=0)           # (5, 3F, F)
    bslab = jnp.concatenate([params["b1_b2"], params["b2_b1"],
                             params["b2_b2"], params["b3_b1"],
                             params["b3_b2"]], axis=0)           # (5, F)

    args = (xp, vmask, pool, w1ads, b1ads, wslab, bslab,
            params["fc_w"], params["fc_b"])

    vspec = pl.BlockSpec(memory_space=pltpu.MemorySpace.VMEM)
    return pl.pallas_call(
        cnn_kernel,
        out_shape=jax.ShapeDtypeStruct((B, C), jnp.float32),
        in_specs=[vspec] * len(args),
        out_specs=vspec,
        scratch_shapes=[pltpu.VMEM((R, F), jnp.float32)],
    )(*args)


def init_params(key, input_channels, num_classes, num_filters):
    ks = list(jax.random.split(key, 16))

    def nrm(k, shape, fan_in):
        return (jax.random.normal(k, shape, jnp.float32) /
                jnp.sqrt(jnp.float32(fan_in)))

    K = KERNEL_SIZE
    p = {}
    # block 1 (in=input_channels, dilation 1, has 1x1 downsample)
    p["b1_w1"] = nrm(ks[0], (K, input_channels, num_filters), K * input_channels)
    p["b1_b1"] = nrm(ks[1], (1, num_filters), num_filters)
    p["b1_w2"] = nrm(ks[2], (K, num_filters, num_filters), K * num_filters)
    p["b1_b2"] = nrm(ks[3], (1, num_filters), num_filters)
    p["b1_dsw"] = nrm(ks[4], (input_channels, num_filters), input_channels)
    p["b1_dsb"] = nrm(ks[5], (1, num_filters), num_filters)
    # block 2 (dilation 2)
    p["b2_w1"] = nrm(ks[6], (K, num_filters, num_filters), K * num_filters)
    p["b2_b1"] = nrm(ks[7], (1, num_filters), num_filters)
    p["b2_w2"] = nrm(ks[8], (K, num_filters, num_filters), K * num_filters)
    p["b2_b2"] = nrm(ks[9], (1, num_filters), num_filters)
    # block 3 (dilation 4)
    p["b3_w1"] = nrm(ks[10], (K, num_filters, num_filters), K * num_filters)
    p["b3_b1"] = nrm(ks[11], (1, num_filters), num_filters)
    p["b3_w2"] = nrm(ks[12], (K, num_filters, num_filters), K * num_filters)
    p["b3_b2"] = nrm(ks[13], (1, num_filters), num_filters)
    # final linear
    p["fc_w"] = nrm(ks[14], (num_filters, num_classes), num_filters)
    p["fc_b"] = nrm(ks[15], (1, num_classes), num_classes)
    return p


def ref_forward(x, lengths, params):
    """Pure-JAX reference (XLA conv path) matching the PyTorch forward."""
    def conv_same(h, w, b, d):
        pad = d * (w.shape[0] - 1) // 2
        out = lax.conv_general_dilated(
            h, w, window_strides=(1,), padding=[(pad, pad)],
            rhs_dilation=(d,), dimension_numbers=('NWC', 'WIO', 'NWC'))
        return out + b

    def block(h, w1, b1, w2, b2, d, dsw=None, dsb=None):
        o = jax.nn.relu(conv_same(h, w1, b1, d))
        o = jax.nn.relu(conv_same(o, w2, b2, d))
        res = h if dsw is None else jnp.einsum('blc,cf->blf', h, dsw) + dsb
        return jax.nn.relu(o + res)

    y = block(x, params["b1_w1"], params["b1_b1"], params["b1_w2"],
              params["b1_b2"], 1, params["b1_dsw"], params["b1_dsb"])
    y = block(y, params["b2_w1"], params["b2_b1"], params["b2_w2"],
              params["b2_b2"], 2)
    y = block(y, params["b3_w1"], params["b3_b1"], params["b3_w2"],
              params["b3_b2"], 4)
    B, L, _ = y.shape
    lens_f = lengths.astype(jnp.float32)
    mask = (jnp.arange(L)[None, :] < lengths[:, None]).astype(jnp.float32)
    pooled = jnp.sum(y * mask[:, :, None], axis=1) / lens_f[:, None]
    return pooled @ params["fc_w"] + params["fc_b"]


if __name__ == "__main__":
    B, L = 2, 16
    input_channels = 2
    num_filters = 32
    num_classes = 4

    key = jax.random.PRNGKey(0)
    kx, kp = jax.random.split(key)
    x = jax.random.normal(kx, (B, L, input_channels), jnp.float32)
    lengths = jnp.array([16, 9], dtype=jnp.int32)
    params = init_params(kp, input_channels, num_classes, num_filters)

    out = cnn_forward(x, lengths, params)
    out = jax.block_until_ready(out)

    ref = ref_forward(x, lengths, params)
    assert out.shape == (B, num_classes)
    assert jnp.allclose(out, ref, atol=1e-4, rtol=1e-4), (out, ref)
    print("KERNEL_OK")
</pallas_src>

<mosaic_0001>
module attributes {stable_mosaic.version = 11 : i64} {
  func.func @cnn_kernel(%arg0: memref<64x2xf32, #tpu.memory_space<vmem>>, %arg1: memref<48x1xf32, #tpu.memory_space<vmem>>, %arg2: memref<2x48xf32, #tpu.memory_space<vmem>>, %arg3: memref<6x64xf32, #tpu.memory_space<vmem>>, %arg4: memref<1x64xf32, #tpu.memory_space<vmem>>, %arg5: memref<5x96x32xf32, #tpu.memory_space<vmem>>, %arg6: memref<5x32xf32, #tpu.memory_space<vmem>>, %arg7: memref<32x4xf32, #tpu.memory_space<vmem>>, %arg8: memref<1x4xf32, #tpu.memory_space<vmem>>, %arg9: memref<2x4xf32, #tpu.memory_space<vmem>>, %arg10: memref<64x32xf32, #tpu.memory_space<vmem>>) attributes {dimension_semantics = [], scalar_prefetch = 0 : i64, scratch_operands = 1 : i64, tpu.core_type = #tpu.core_type<tc>} {
    %c0 = arith.constant 0 : index
    %c0_0 = arith.constant 0 : index
    %0 = vector.load %arg1[%c0, %c0_0] : memref<48x1xf32, #tpu.memory_space<vmem>>, vector<48x1xf32>
    %cst = arith.constant 0.000000e+00 : f32
    %1 = vector.broadcast %cst : f32 to vector<8x32xf32>
    %c0_1 = arith.constant 0 : index
    %c0_2 = arith.constant 0 : index
    %2 = vector.load %arg10[%c0_1, %c0_2] : memref<64x32xf32, #tpu.memory_space<vmem>>, vector<8x32xf32>
    tpu.vector_store %arg10[%c0_1, %c0_2], %1 {strides = array<i32>} : memref<64x32xf32, #tpu.memory_space<vmem>>, vector<8x32xf32>,
    %cst_3 = arith.constant 0.000000e+00 : f32
    %3 = vector.broadcast %cst_3 : f32 to vector<8x32xf32>
    %c56 = arith.constant 56 : index
    %c0_4 = arith.constant 0 : index
    %4 = vector.load %arg10[%c56, %c0_4] : memref<64x32xf32, #tpu.memory_space<vmem>>, vector<8x32xf32>
    tpu.vector_store %arg10[%c56, %c0_4], %3 {strides = array<i32>} : memref<64x32xf32, #tpu.memory_space<vmem>>, vector<8x32xf32>,
    %c7 = arith.constant 7 : index
    %c0_5 = arith.constant 0 : index
    %5 = vector.load %arg0[%c7, %c0_5] : memref<64x2xf32, #tpu.memory_space<vmem>>, vector<48x2xf32>
    %c8 = arith.constant 8 : index
    %c0_6 = arith.constant 0 : index
    %6 = vector.load %arg0[%c8, %c0_6] : memref<64x2xf32, #tpu.memory_space<vmem>>, vector<48x2xf32>
    %c9 = arith.constant 9 : index
    %c0_7 = arith.constant 0 : index
    %7 = vector.load %arg0[%c9, %c0_7] : memref<64x2xf32, #tpu.memory_space<vmem>>, vector<48x2xf32>
    %8 = tpu.concatenate %5, %6, %7 in 1 : vector<48x2xf32>, vector<48x2xf32>, vector<48x2xf32> -> vector<48x6xf32>
    %c0_8 = arith.constant 0 : index
    %c0_9 = arith.constant 0 : index
    %9 = vector.load %arg3[%c0_8, %c0_9] : memref<6x64xf32, #tpu.memory_space<vmem>>, vector<6x64xf32>
    %cst_10 = arith.constant dense<0.000000e+00> : vector<48x64xf32>
    %10 = tpu.matmul %8, %9, %cst_10 {dimension_numbers = #tpu.dot_dimension_numbers<[1], [0], [0], [1], [0, 0, 1, 1], [], []>} : vector<48x6xf32>, vector<6x64xf32>, vector<48x64xf32> -> vector<48x64xf32>
    %c0_11 = arith.constant 0 : index
    %c0_12 = arith.constant 0 : index
    %11 = vector.load %arg4[%c0_11, %c0_12] : memref<1x64xf32, #tpu.memory_space<vmem>>, vector<1x64xf32>
    %12 = vector.broadcast %11 : vector<1x64xf32> to vector<48x64xf32>
    %13 = arith.addf %10, %12 : vector<48x64xf32>
    %14 = vector.extract_strided_slice %13 {offsets = [0, 0], sizes = [48, 32], strides = [1, 1]} : vector<48x64xf32> to vector<48x32xf32>
    %cst_13 = arith.constant 0.000000e+00 : f32
    %15 = vector.broadcast %cst_13 : f32 to vector<48x32xf32>
    %16 = arith.maximumf %14, %15 : vector<48x32xf32>
    %17 = vector.broadcast %0 : vector<48x1xf32> to vector<48x32xf32>
    %18 = arith.mulf %16, %17 : vector<48x32xf32>
    %c8_14 = arith.constant 8 : index
    %c0_15 = arith.constant 0 : index
    %19 = vector.load %arg10[%c8_14, %c0_15] : memref<64x32xf32, #tpu.memory_space<vmem>>, vector<48x32xf32>
    tpu.vector_store %arg10[%c8_14, %c0_15], %18 {strides = array<i32>} : memref<64x32xf32, #tpu.memory_space<vmem>>, vector<48x32xf32>,
    %c0_16 = arith.constant 0 : index
    %c0_17 = arith.constant 0 : index
    %c0_18 = arith.constant 0 : index
    %20 = vector.load %arg5[%c0_16, %c0_17, %c0_18] : memref<5x96x32xf32, #tpu.memory_space<vmem>>, vector<1x96x32xf32>
    %21 = vector.shape_cast %20 : vector<1x96x32xf32> to vector<96x32xf32>
    %c0_19 = arith.constant 0 : index
    %c0_20 = arith.constant 0 : index
    %22 = vector.load %arg6[%c0_19, %c0_20] : memref<5x32xf32, #tpu.memory_space<vmem>>, vector<1x32xf32>
    %c7_21 = arith.constant 7 : index
    %c0_22 = arith.constant 0 : index
    %23 = vector.load %arg10[%c7_21, %c0_22] : memref<64x32xf32, #tpu.memory_space<vmem>>, vector<48x32xf32>
    %c8_23 = arith.constant 8 : index
    %c0_24 = arith.constant 0 : index
    %24 = vector.load %arg10[%c8_23, %c0_24] : memref<64x32xf32, #tpu.memory_space<vmem>>, vector<48x32xf32>
    %c9_25 = arith.constant 9 : index
    %c0_26 = arith.constant 0 : index
    %25 = vector.load %arg10[%c9_25, %c0_26] : memref<64x32xf32, #tpu.memory_space<vmem>>, vector<48x32xf32>
    %26 = tpu.concatenate %23, %24, %25 in 1 : vector<48x32xf32>, vector<48x32xf32>, vector<48x32xf32> -> vector<48x96xf32>
    %cst_27 = arith.constant dense<0.000000e+00> : vector<48x32xf32>
    %27 = tpu.matmul %26, %21, %cst_27 {dimension_numbers = #tpu.dot_dimension_numbers<[1], [0], [0], [1], [0, 0, 1, 1], [], []>} : vector<48x96xf32>, vector<96x32xf32>, vector<48x32xf32> -> vector<48x32xf32>
    %28 = vector.broadcast %22 : vector<1x32xf32> to vector<48x32xf32>
    %29 = arith.addf %27, %28 : vector<48x32xf32>
    %cst_28 = arith.constant 0.000000e+00 : f32
    %30 = vector.broadcast %cst_28 : f32 to vector<48x32xf32>
    %31 = arith.maximumf %29, %30 : vector<48x32xf32>
    %32 = vector.extract_strided_slice %13 {offsets = [0, 32], sizes = [48, 32], strides = [1, 1]} : vector<48x64xf32> to vector<48x32xf32>
    %33 = arith.addf %31, %32 : vector<48x32xf32>
    %cst_29 = arith.constant 0.000000e+00 : f32
    %34 = vector.broadcast %cst_29 : f32 to vector<48x32xf32>
    %35 = arith.maximumf %33, %34 : vector<48x32xf32>
    %36 = vector.broadcast %0 : vector<48x1xf32> to vector<48x32xf32>
    %37 = arith.mulf %35, %36 : vector<48x32xf32>
    %c8_30 = arith.constant 8 : index
    %c0_31 = arith.constant 0 : index
    %38 = vector.load %arg10[%c8_30, %c0_31] : memref<64x32xf32, #tpu.memory_space<vmem>>, vector<48x32xf32>
    tpu.vector_store %arg10[%c8_30, %c0_31], %37 {strides = array<i32>} : memref<64x32xf32, #tpu.memory_space<vmem>>, vector<48x32xf32>,
    %c1 = arith.constant 1 : index
    %c0_32 = arith.constant 0 : index
    %c0_33 = arith.constant 0 : index
    %39 = vector.load %arg5[%c1, %c0_32, %c0_33] : memref<5x96x32xf32, #tpu.memory_space<vmem>>, vector<1x96x32xf32>
    %40 = vector.shape_cast %39 : vector<1x96x32xf32> to vector<96x32xf32>
    %c1_34 = arith.constant 1 : index
    %c0_35 = arith.constant 0 : index
    %41 = vector.load %arg6[%c1_34, %c0_35] : memref<5x32xf32, #tpu.memory_space<vmem>>, vector<1x32xf32>
    %c6 = arith.constant 6 : index
    %c0_36 = arith.constant 0 : index
    %42 = vector.load %arg10[%c6, %c0_36] : memref<64x32xf32, #tpu.memory_space<vmem>>, vector<48x32xf32>
    %c8_37 = arith.constant 8 : index
    %c0_38 = arith.constant 0 : index
    %43 = vector.load %arg10[%c8_37, %c0_38] : memref<64x32xf32, #tpu.memory_space<vmem>>, vector<48x32xf32>
    %c10 = arith.constant 10 : index
    %c0_39 = arith.constant 0 : index
    %44 = vector.load %arg10[%c10, %c0_39] : memref<64x32xf32, #tpu.memory_space<vmem>>, vector<48x32xf32>
    %45 = tpu.concatenate %42, %43, %44 in 1 : vector<48x32xf32>, vector<48x32xf32>, vector<48x32xf32> -> vector<48x96xf32>
    %cst_40 = arith.constant dense<0.000000e+00> : vector<48x32xf32>
    %46 = tpu.matmul %45, %40, %cst_40 {dimension_numbers = #tpu.dot_dimension_numbers<[1], [0], [0], [1], [0, 0, 1, 1], [], []>} : vector<48x96xf32>, vector<96x32xf32>, vector<48x32xf32> -> vector<48x32xf32>
    %47 = vector.broadcast %41 : vector<1x32xf32> to vector<48x32xf32>
    %48 = arith.addf %46, %47 : vector<48x32xf32>
    %cst_41 = arith.constant 0.000000e+00 : f32
    %49 = vector.broadcast %cst_41 : f32 to vector<48x32xf32>
    %50 = arith.maximumf %48, %49 : vector<48x32xf32>
    %51 = vector.broadcast %0 : vector<48x1xf32> to vector<48x32xf32>
    %52 = arith.mulf %50, %51 : vector<48x32xf32>
    %c8_42 = arith.constant 8 : index
    %c0_43 = arith.constant 0 : index
    %53 = vector.load %arg10[%c8_42, %c0_43] : memref<64x32xf32, #tpu.memory_space<vmem>>, vector<48x32xf32>
    tpu.vector_store %arg10[%c8_42, %c0_43], %52 {strides = array<i32>} : memref<64x32xf32, #tpu.memory_space<vmem>>, vector<48x32xf32>,
    %c2 = arith.constant 2 : index
    %c0_44 = arith.constant 0 : index
    %c0_45 = arith.constant 0 : index
    %54 = vector.load %arg5[%c2, %c0_44, %c0_45] : memref<5x96x32xf32, #tpu.memory_space<vmem>>, vector<1x96x32xf32>
    %55 = vector.shape_cast %54 : vector<1x96x32xf32> to vector<96x32xf32>
    %c2_46 = arith.constant 2 : index
    %c0_47 = arith.constant 0 : index
    %56 = vector.load %arg6[%c2_46, %c0_47] : memref<5x32xf32, #tpu.memory_space<vmem>>, vector<1x32xf32>
    %c6_48 = arith.constant 6 : index
    %c0_49 = arith.constant 0 : index
    %57 = vector.load %arg10[%c6_48, %c0_49] : memref<64x32xf32, #tpu.memory_space<vmem>>, vector<48x32xf32>
    %c8_50 = arith.constant 8 : index
    %c0_51 = arith.constant 0 : index
    %58 = vector.load %arg10[%c8_50, %c0_51] : memref<64x32xf32, #tpu.memory_space<vmem>>, vector<48x32xf32>
    %c10_52 = arith.constant 10 : index
    %c0_53 = arith.constant 0 : index
    %59 = vector.load %arg10[%c10_52, %c0_53] : memref<64x32xf32, #tpu.memory_space<vmem>>, vector<48x32xf32>
    %60 = tpu.concatenate %57, %58, %59 in 1 : vector<48x32xf32>, vector<48x32xf32>, vector<48x32xf32> -> vector<48x96xf32>
    %cst_54 = arith.constant dense<0.000000e+00> : vector<48x32xf32>
    %61 = tpu.matmul %60, %55, %cst_54 {dimension_numbers = #tpu.dot_dimension_numbers<[1], [0], [0], [1], [0, 0, 1, 1], [], []>} : vector<48x96xf32>, vector<96x32xf32>, vector<48x32xf32> -> vector<48x32xf32>
    %62 = vector.broadcast %56 : vector<1x32xf32> to vector<48x32xf32>
    %63 = arith.addf %61, %62 : vector<48x32xf32>
    %cst_55 = arith.constant 0.000000e+00 : f32
    %64 = vector.broadcast %cst_55 : f32 to vector<48x32xf32>
    %65 = arith.maximumf %63, %64 : vector<48x32xf32>
    %66 = arith.addf %65, %37 : vector<48x32xf32>
    %cst_56 = arith.constant 0.000000e+00 : f32
    %67 = vector.broadcast %cst_56 : f32 to vector<48x32xf32>
    %68 = arith.maximumf %66, %67 : vector<48x32xf32>
    %69 = vector.broadcast %0 : vector<48x1xf32> to vector<48x32xf32>
    %70 = arith.mulf %68, %69 : vector<48x32xf32>
    %c8_57 = arith.constant 8 : index
    %c0_58 = arith.constant 0 : index
    %71 = vector.load %arg10[%c8_57, %c0_58] : memref<64x32xf32, #tpu.memory_space<vmem>>, vector<48x32xf32>
    tpu.vector_store %arg10[%c8_57, %c0_58], %70 {strides = array<i32>} : memref<64x32xf32, #tpu.memory_space<vmem>>, vector<48x32xf32>,
    %c3 = arith.constant 3 : index
    %c0_59 = arith.constant 0 : index
    %c0_60 = arith.constant 0 : index
    %72 = vector.load %arg5[%c3, %c0_59, %c0_60] : memref<5x96x32xf32, #tpu.memory_space<vmem>>, vector<1x96x32xf32>
    %73 = vector.shape_cast %72 : vector<1x96x32xf32> to vector<96x32xf32>
    %c3_61 = arith.constant 3 : index
    %c0_62 = arith.constant 0 : index
    %74 = vector.load %arg6[%c3_61, %c0_62] : memref<5x32xf32, #tpu.memory_space<vmem>>, vector<1x32xf32>
    %c4 = arith.constant 4 : index
    %c0_63 = arith.constant 0 : index
    %75 = vector.load %arg10[%c4, %c0_63] : memref<64x32xf32, #tpu.memory_space<vmem>>, vector<48x32xf32>
    %c8_64 = arith.constant 8 : index
    %c0_65 = arith.constant 0 : index
    %76 = vector.load %arg10[%c8_64, %c0_65] : memref<64x32xf32, #tpu.memory_space<vmem>>, vector<48x32xf32>
    %c12 = arith.constant 12 : index
    %c0_66 = arith.constant 0 : index
    %77 = vector.load %arg10[%c12, %c0_66] : memref<64x32xf32, #tpu.memory_space<vmem>>, vector<48x32xf32>
    %78 = tpu.concatenate %75, %76, %77 in 1 : vector<48x32xf32>, vector<48x32xf32>, vector<48x32xf32> -> vector<48x96xf32>
    %cst_67 = arith.constant dense<0.000000e+00> : vector<48x32xf32>
    %79 = tpu.matmul %78, %73, %cst_67 {dimension_numbers = #tpu.dot_dimension_numbers<[1], [0], [0], [1], [0, 0, 1, 1], [], []>} : vector<48x96xf32>, vector<96x32xf32>, vector<48x32xf32> -> vector<48x32xf32>
    %80 = vector.broadcast %74 : vector<1x32xf32> to vector<48x32xf32>
    %81 = arith.addf %79, %80 : vector<48x32xf32>
    %cst_68 = arith.constant 0.000000e+00 : f32
    %82 = vector.broadcast %cst_68 : f32 to vector<48x32xf32>
    %83 = arith.maximumf %81, %82 : vector<48x32xf32>
    %84 = vector.broadcast %0 : vector<48x1xf32> to vector<48x32xf32>
    %85 = arith.mulf %83, %84 : vector<48x32xf32>
    %c8_69 = arith.constant 8 : index
    %c0_70 = arith.constant 0 : index
    %86 = vector.load %arg10[%c8_69, %c0_70] : memref<64x32xf32, #tpu.memory_space<vmem>>, vector<48x32xf32>
    tpu.vector_store %arg10[%c8_69, %c0_70], %85 {strides = array<i32>} : memref<64x32xf32, #tpu.memory_space<vmem>>, vector<48x32xf32>,
    %c4_71 = arith.constant 4 : index
    %c0_72 = arith.constant 0 : index
    %c0_73 = arith.constant 0 : index
    %87 = vector.load %arg5[%c4_71, %c0_72, %c0_73] : memref<5x96x32xf32, #tpu.memory_space<vmem>>, vector<1x96x32xf32>
    %88 = vector.shape_cast %87 : vector<1x96x32xf32> to vector<96x32xf32>
    %c4_74 = arith.constant 4 : index
    %c0_75 = arith.constant 0 : index
    %89 = vector.load %arg6[%c4_74, %c0_75] : memref<5x32xf32, #tpu.memory_space<vmem>>, vector<1x32xf32>
    %c4_76 = arith.constant 4 : index
    %c0_77 = arith.constant 0 : index
    %90 = vector.load %arg10[%c4_76, %c0_77] : memref<64x32xf32, #tpu.memory_space<vmem>>, vector<48x32xf32>
    %c8_78 = arith.constant 8 : index
    %c0_79 = arith.constant 0 : index
    %91 = vector.load %arg10[%c8_78, %c0_79] : memref<64x32xf32, #tpu.memory_space<vmem>>, vector<48x32xf32>
    %c12_80 = arith.constant 12 : index
    %c0_81 = arith.constant 0 : index
    %92 = vector.load %arg10[%c12_80, %c0_81] : memref<64x32xf32, #tpu.memory_space<vmem>>, vector<48x32xf32>
    %93 = tpu.concatenate %90, %91, %92 in 1 : vector<48x32xf32>, vector<48x32xf32>, vector<48x32xf32> -> vector<48x96xf32>
    %cst_82 = arith.constant dense<0.000000e+00> : vector<48x32xf32>
    %94 = tpu.matmul %93, %88, %cst_82 {dimension_numbers = #tpu.dot_dimension_numbers<[1], [0], [0], [1], [0, 0, 1, 1], [], []>} : vector<48x96xf32>, vector<96x32xf32>, vector<48x32xf32> -> vector<48x32xf32>
    %95 = vector.broadcast %89 : vector<1x32xf32> to vector<48x32xf32>
    %96 = arith.addf %94, %95 : vector<48x32xf32>
    %cst_83 = arith.constant 0.000000e+00 : f32
    %97 = vector.broadcast %cst_83 : f32 to vector<48x32xf32>
    %98 = arith.maximumf %96, %97 : vector<48x32xf32>
    %99 = arith.addf %98, %70 : vector<48x32xf32>
    %cst_84 = arith.constant 0.000000e+00 : f32
    %100 = vector.broadcast %cst_84 : f32 to vector<48x32xf32>
    %101 = arith.maximumf %99, %100 : vector<48x32xf32>
    %c0_85 = arith.constant 0 : index
    %c0_86 = arith.constant 0 : index
    %102 = vector.load %arg2[%c0_85, %c0_86] : memref<2x48xf32, #tpu.memory_space<vmem>>, vector<2x48xf32>
    %cst_87 = arith.constant dense<0.000000e+00> : vector<2x32xf32>
    %103 = tpu.matmul %102, %101, %cst_87 {dimension_numbers = #tpu.dot_dimension_numbers<[1], [0], [0], [1], [0, 0, 1, 1], [], []>} : vector<2x48xf32>, vector<48x32xf32>, vector<2x32xf32> -> vector<2x32xf32>
    %c0_88 = arith.constant 0 : index
    %c0_89 = arith.constant 0 : index
    %104 = vector.load %arg7[%c0_88, %c0_89] : memref<32x4xf32, #tpu.memory_space<vmem>>, vector<32x4xf32>
    %cst_90 = arith.constant dense<0.000000e+00> : vector<2x4xf32>
    %105 = tpu.matmul %103, %104, %cst_90 {dimension_numbers = #tpu.dot_dimension_numbers<[1], [0], [0], [1], [0, 0, 1, 1], [], []>} : vector<2x32xf32>, vector<32x4xf32>, vector<2x4xf32> -> vector<2x4xf32>
    %c0_91 = arith.constant 0 : index
    %c0_92 = arith.constant 0 : index
    %106 = vector.load %arg8[%c0_91, %c0_92] : memref<1x4xf32, #tpu.memory_space<vmem>>, vector<1x4xf32>
    %107 = vector.broadcast %106 : vector<1x4xf32> to vector<2x4xf32>
    %108 = arith.addf %105, %107 : vector<2x4xf32>
    %c0_93 = arith.constant 0 : index
    %c0_94 = arith.constant 0 : index
    %109 = vector.load %arg9[%c0_93, %c0_94] : memref<2x4xf32, #tpu.memory_space<vmem>>, vector<2x4xf32>
    tpu.vector_store %arg9[%c0_93, %c0_94], %108 {strides = array<i32>} : memref<2x4xf32, #tpu.memory_space<vmem>>, vector<2x4xf32>,
    return
  }
}

</mosaic_0001>

<llo_original>
// kernel: tpu_custom_call.1
$region0: #{tpu_custom_call.1}
  #allocation0 [shape = 'u32[]', space=smem, size = 0x4, offset = 0x4, fixed_abs, tag = 'smem constant byte address 0x4 - core index']
  #allocation1 [shape = 'u32[144,128]{1,0:T(1,128)}', space=vmem, size = 0x12000, scoped, tag = 'internal scratch']
  #allocation2 [shape = 'f32[64,32]{1,0:T(8,128)}', space=vmem, size = 0x8000, scoped, tag = 'scratch operand']
  %s0 = inlined_call_operand.vmem [shape: f32[64,2], index: 0, kind: input, shape index: {}]
  %s1 = inlined_call_operand.vmem [shape: f32[48,1], index: 1, kind: input, shape index: {}]
  %s2 = inlined_call_operand.vmem [shape: f32[2,48], index: 2, kind: input, shape index: {}]
  %s3 = inlined_call_operand.vmem [shape: f32[6,64], index: 3, kind: input, shape index: {}]
  %s4 = inlined_call_operand.vmem [shape: f32[1,64], index: 4, kind: input, shape index: {}]
  %s5 = inlined_call_operand.vmem [shape: f32[5,96,32], index: 5, kind: input, shape index: {}]
  %s6 = inlined_call_operand.vmem [shape: f32[5,32], index: 6, kind: input, shape index: {}]
  %s7 = inlined_call_operand.vmem [shape: f32[32,4], index: 7, kind: input, shape index: {}]
  %s8 = inlined_call_operand.vmem [shape: f32[1,4], index: 8, kind: input, shape index: {}]
  %s9 = inlined_call_operand.hbm [shape: f32[2,4], index: 9, kind: output, shape index: {}]
  %s10 = sld [smem:[#allocation0]]
  $region46: #{tpu_custom_call.1} parent=0
    _
  %s12 = ssub.s32 1, %s10
  %s13 = scalar_select 0, %s12, %s10
  $region1: #{tpu_custom_call.1} parent=0
    #allocation3 [shape = 'u8[1024]{0}', space=vmem, size = 0x400, scoped, tag = 'output window, operand 0, single buffered']
    #allocation4 [shape = 's32[1]{0}', space=sflag, size = 0x4, scoped, tag = 'scoped memory for tpu_custom_call.1']
    %14 = vsyncpa [#allocation4], 0
    // Predicated region
    $region2: #{tpu_custom_call.1} parent=1 // pred_check
      _
    $region3: #{tpu_custom_call.1} parent=1 // pred_check_branch
      %16 = sbr.rel (0) target = $region5
    $region4: #{tpu_custom_call.1} parent=1 // pred_region
      _
    $region5: #{tpu_custom_call.1} parent=1 // pred_fallthru
      _
    // Predicated region
    $region6: #{tpu_custom_call.1} parent=1 // pred_check
      _
    $region7: #{tpu_custom_call.1} parent=1 // pred_check_branch
      %18 = sbr.rel (0) target = $region9
    $region8: #{tpu_custom_call.1} parent=1 // pred_region
      _
    $region9: #{tpu_custom_call.1} parent=1 // pred_fallthru
      _
    // Predicated region
    $region10: #{tpu_custom_call.1} parent=1 // pred_check
      _
    $region11: #{tpu_custom_call.1} parent=1 // pred_check_branch
      %20 = sbr.rel (0) target = $region13
    $region12: #{tpu_custom_call.1} parent=1 // pred_region
      _
    $region13: #{tpu_custom_call.1} parent=1 // pred_fallthru
      _
    // Predicated region
    $region14: #{tpu_custom_call.1} parent=1 // pred_check
      _
    $region15: #{tpu_custom_call.1} parent=1 // pred_check_branch
      %22 = sbr.rel (0) target = $region17
    $region16: #{tpu_custom_call.1} parent=1 // pred_region
      _
    $region17: #{tpu_custom_call.1} parent=1 // pred_fallthru
      _
    // Predicated region
    $region18: #{tpu_custom_call.1} parent=1 // pred_check
      _
    $region19: #{tpu_custom_call.1} parent=1 // pred_check_branch
      %24 = sbr.rel (0) target = $region21
    $region20: #{tpu_custom_call.1} parent=1 // pred_region
      _
    $region21: #{tpu_custom_call.1} parent=1 // pred_fallthru
      _
    // Predicated region
    $region22: #{tpu_custom_call.1} parent=1 // pred_check
      _
    $region23: #{tpu_custom_call.1} parent=1 // pred_check_branch
      %26 = sbr.rel (0) target = $region25
    $region24: #{tpu_custom_call.1} parent=1 // pred_region
      _
    $region25: #{tpu_custom_call.1} parent=1 // pred_fallthru
      _
    // Predicated region
    $region26: #{tpu_custom_call.1} parent=1 // pred_check
      _
    $region27: #{tpu_custom_call.1} parent=1 // pred_check_branch
      %28 = sbr.rel (0) target = $region29
    $region28: #{tpu_custom_call.1} parent=1 // pred_region
      _
    $region29: #{tpu_custom_call.1} parent=1 // pred_fallthru
      _
    // Predicated region
    $region30: #{tpu_custom_call.1} parent=1 // pred_check
      _
    $region31: #{tpu_custom_call.1} parent=1 // pred_check_branch
      %30 = sbr.rel (0) target = $region33
    $region32: #{tpu_custom_call.1} parent=1 // pred_region
      _
    $region33: #{tpu_custom_call.1} parent=1 // pred_fallthru
      _
    // Predicated region
    $region34: #{tpu_custom_call.1} parent=1 // pred_check
      _
    $region35: #{tpu_custom_call.1} parent=1 // pred_check_branch
      %32 = sbr.rel (0) target = $region37
    $region36: #{tpu_custom_call.1} parent=1 // pred_region
      _
    $region37: #{tpu_custom_call.1} parent=1 // pred_fallthru
      _
    %v33 = vld [vmem:[%s1] sm:$0xff]
    %v34 = vld [vmem:[%s1 + $0x8] sm:$0xff]
    %v35 = vld [vmem:[%s1 + $0x10] sm:$0xff]
    %v36 = vld [vmem:[%s1 + $0x18] sm:$0xff]
    %v37 = vld [vmem:[%s1 + $0x20] sm:$0xff]
    %v38 = vld [vmem:[%s1 + $0x28] sm:$0xff]
    %vm39 = vcmask 261120
    %40 = vst.msk [vmem:[#allocation2] sm:$0xff] %vm39, 0.0
    %41 = vst.msk [vmem:[#allocation2 + $0x38] sm:$0xff] %vm39, 0.0
    %v42 = vld [vmem:[%s0 + $0x7] sm:$0xff]
    %v43 = vld [vmem:[%s0 + $0xf] sm:$0xff]
    %v44 = vld [vmem:[%s0 + $0x17] sm:$0xff]
    %v45 = vld [vmem:[%s0 + $0x1f] sm:$0xff]
    %v46 = vld [vmem:[%s0 + $0x27] sm:$0xff]
    %v47 = vld [vmem:[%s0 + $0x2f] sm:$0xff]
    %v48 = vld [vmem:[%s0 + $0x8] sm:$0xff]
    %v49 = vld [vmem:[%s0 + $0x10] sm:$0xff]
    %v50 = vld [vmem:[%s0 + $0x18] sm:$0xff]
    %v51 = vld [vmem:[%s0 + $0x20] sm:$0xff]
    %v52 = vld [vmem:[%s0 + $0x28] sm:$0xff]
    %v53 = vld [vmem:[%s0 + $0x30] sm:$0xff]
    %v54 = vld [vmem:[%s0 + $0x9] sm:$0xff]
    %v55 = vld [vmem:[%s0 + $0x11] sm:$0xff]
    %v56 = vld [vmem:[%s0 + $0x19] sm:$0xff]
    %v57 = vld [vmem:[%s0 + $0x21] sm:$0xff]
    %v58 = vld [vmem:[%s0 + $0x29] sm:$0xff]
    %v59 = vld [vmem:[%s0 + $0x31] sm:$0xff]
    %66 = vrot.lane.b32.xlu0 %v48, 2
    %v67 = vpop.permute.xlu0 %66
    %68 = vrot.lane.b32.xlu0 %v49, 2
    %v69 = vpop.permute.xlu0 %68
    %70 = vrot.lane.b32.xlu0 %v50, 2
    %v71 = vpop.permute.xlu0 %70
    %72 = vrot.lane.b32.xlu0 %v51, 2
    %v73 = vpop.permute.xlu0 %72
    %74 = vrot.lane.b32.xlu0 %v52, 2
    %v75 = vpop.permute.xlu0 %74
    %76 = vrot.lane.b32.xlu0 %v53, 2
    %v77 = vpop.permute.xlu0 %76
    %90 = vrot.lane.b32.xlu0 %v54, 4
    %v91 = vpop.permute.xlu0 %90
    %92 = vrot.lane.b32.xlu0 %v55, 4
    %v93 = vpop.permute.xlu0 %92
    %94 = vrot.lane.b32.xlu0 %v56, 4
    %v95 = vpop.permute.xlu0 %94
    %96 = vrot.lane.b32.xlu0 %v57, 4
    %v97 = vpop.permute.xlu0 %96
    %98 = vrot.lane.b32.xlu0 %v58, 4
    %v99 = vpop.permute.xlu0 %98
    %100 = vrot.lane.b32.xlu0 %v59, 4
    %v101 = vpop.permute.xlu0 %100
    %vm108 = vcmask 15360
    %v109 = vsel %vm108, %v42, %v67
    %v110 = vsel %vm108, %v43, %v69
    %v111 = vsel %vm108, %v44, %v71
    %v112 = vsel %vm108, %v45, %v73
    %v113 = vsel %vm108, %v46, %v75
    %v114 = vsel %vm108, %v47, %v77
    %vm115 = vcmask 31744
    %v116 = vsel %vm115, %v109, %v91
    %v117 = vsel %vm115, %v110, %v93
    %v118 = vsel %vm115, %v111, %v95
    %v119 = vsel %vm115, %v112, %v97
    %v120 = vsel %vm115, %v113, %v99
    %v121 = vsel %vm115, %v114, %v101
    %v122 = vld [vmem:[%s3] sm:$0x3f]
    %v123 = vld [vmem:[%s4] sm:$0x1]
    %v125 = vlaneseq
    %v126 = vshrl.u32 %v125, 7
    %v127 = vsub.s32 0, %v126
    %v128 = vrot.slane %v123, %v127
    %vm130 = vcmask 48128
    %v132 = vsel %vm130, %v116, 0
    %v135 = vsel %vm130, %v117, 0
    %v138 = vsel %vm130, %v118, 0
    %v141 = vsel %vm130, %v119, 0
    %v144 = vsel %vm130, %v120, 0
    %v147 = vsel %vm130, %v121, 0
    %vm149 = vcmask 1045504
    %v151 = vsel %vm149, %v122, 0
    %153 = vmatprep.subr.mxu0 0.0
    %154 = vmatpush1.msra.mxu0 0.0
    %155 = vmatprep.subr.mxu0 0.0
    %156 = vmatpush1.msra.mxu0 0.0
    %157 = vmatprep.subr.mxu0 0.0
    %158 = vmatpush1.msra.mxu0 0.0
    %159 = vmatprep.subr.mxu0 0.0
    %160 = vmatpush1.msra.mxu0 0.0
    %161 = vmatprep.subr.mxu0 0.0
    %162 = vmatpush1.msra.mxu0 0.0
    %163 = vmatprep.subr.mxu0 0.0
    %164 = vmatpush1.msra.mxu0 0.0
    %165 = vmatprep.subr.mxu0 0.0
    %166 = vmatpush1.msra.mxu0 0.0
    %167 = vmatprep.subr.mxu0 0.0
    %168 = vmatpush1.msra.mxu0 0.0
    %169 = vmatprep.subr.mxu0 0.0
    %170 = vmatpush1.msra.mxu0 0.0
    %171 = vmatprep.subr.mxu0 0.0
    %172 = vmatpush1.msra.mxu0 0.0
    %173 = vmatprep.subr.mxu0 0.0
    %174 = vmatpush1.msra.mxu0 0.0
    %175 = vmatprep.subr.mxu0 0.0
    %176 = vmatpush1.msra.mxu0 0.0
    %177 = vmatprep.subr.mxu0 0.0
    %178 = vmatpush1.msra.mxu0 0.0
    %179 = vmatprep.subr.mxu0 0.0
    %180 = vmatpush1.msra.mxu0 0.0
    %181 = vmatprep.subr.mxu0 0.0
    %182 = vmatpush1.msra.mxu0 0.0
    %183 = vmatprep.subr.mxu0 0.0
    %184 = vmatpush1.msra.mxu0 %v151
    %185 = vmatprep.subr.mxu0 0.0
    %186 = vmatpush2.msra.mxu0 0.0
    %187 = vmatprep.subr.mxu0 0.0
    %188 = vmatpush2.msra.mxu0 0.0
    %189 = vmatprep.subr.mxu0 0.0
    %190 = vmatpush2.msra.mxu0 0.0
    %191 = vmatprep.subr.mxu0 0.0
    %192 = vmatpush2.msra.mxu0 0.0
    %193 = vmatprep.subr.mxu0 0.0
    %194 = vmatpush2.msra.mxu0 0.0
    %195 = vmatprep.subr.mxu0 0.0
    %196 = vmatpush2.msra.mxu0 0.0
    %197 = vmatprep.subr.mxu0 0.0
    %198 = vmatpush2.msra.mxu0 0.0
    %199 = vmatprep.subr.mxu0 0.0
    %200 = vmatpush2.msra.mxu0 0.0
    %201 = vmatprep.subr.mxu0 0.0
    %202 = vmatpush2.msra.mxu0 0.0
    %203 = vmatprep.subr.mxu0 0.0
    %204 = vmatpush2.msra.mxu0 0.0
    %205 = vmatprep.subr.mxu0 0.0
    %206 = vmatpush2.msra.mxu0 0.0
    %207 = vmatprep.subr.mxu0 0.0
    %208 = vmatpush2.msra.mxu0 0.0
    %209 = vmatprep.subr.mxu0 0.0
    %210 = vmatpush2.msra.mxu0 0.0
    %211 = vmatprep.subr.mxu0 0.0
    %212 = vmatpush2.msra.mxu0 0.0
    %213 = vmatprep.subr.mxu0 0.0
    %214 = vmatpush2.msra.mxu0 0.0
    %215 = vmatprep.subr.mxu0 0.0
    %216 = vmatpush2.msra.mxu0 0.0
    %217 = vmatprep.mubr.f32.mxu0 0.0
    %218 = vmatmul.mubr.f32.gmra.mxu0 %v132
    %v219 = vpop.f32.mrf.mxu0
    %v220 = vadd.f32 %v128, %v219
    %v221 = vpop.f32.mrf.mxu0
    %222 = vmatprep.mubr.f32.mxu0 0.0
    %223 = vmatmul.mubr.f32.gmra.mxu0 %v135
    %v224 = vpop.f32.mrf.mxu0
    %v225 = vadd.f32 %v128, %v224
    %v226 = vpop.f32.mrf.mxu0
    %227 = vmatprep.mubr.f32.mxu0 0.0
    %228 = vmatmul.mubr.f32.gmra.mxu0 %v138
    %v229 = vpop.f32.mrf.mxu0
    %v230 = vadd.f32 %v128, %v229
    %v231 = vpop.f32.mrf.mxu0
    %232 = vmatprep.mubr.f32.mxu0 0.0
    %233 = vmatmul.mubr.f32.gmra.mxu0 %v141
    %v234 = vpop.f32.mrf.mxu0
    %v235 = vadd.f32 %v128, %v234
    %v236 = vpop.f32.mrf.mxu0
    %237 = vmatprep.mubr.f32.mxu0 0.0
    %238 = vmatmul.mubr.f32.gmra.mxu0 %v144
    %v239 = vpop.f32.mrf.mxu0
    %v240 = vadd.f32 %v128, %v239
    %v241 = vpop.f32.mrf.mxu0
    %242 = vmatprep.mubr.f32.mxu0 0.0
    %243 = vmatmul.mubr.f32.gmra.mxu0 %v147
    %v244 = vpop.f32.mrf.mxu0
    %v245 = vadd.f32 %v128, %v244
    %v246 = vpop.f32.mrf.mxu0
    %247 = vdwg.mxu0
    %v248 = vmax.f32 %v220, 0.0
    %v249 = vmax.f32 %v225, 0.0
    %v250 = vmax.f32 %v230, 0.0
    %v251 = vmax.f32 %v235, 0.0
    %v252 = vmax.f32 %v240, 0.0
    %v253 = vmax.f32 %v245, 0.0
    %255 = vset.pattern.permute.xlu0 0
    %256 = vperm.xlu0 %255, %v33
    %v257 = vpop.permute.xlu0 %256
    %260 = vset.pattern.permute.xlu0 0
    %261 = vperm.xlu0 %260, %v34
    %v262 = vpop.permute.xlu0 %261
    %265 = vset.pattern.permute.xlu0 0
    %266 = vperm.xlu0 %265, %v35
    %v267 = vpop.permute.xlu0 %266
    %270 = vset.pattern.permute.xlu0 0
    %271 = vperm.xlu0 %270, %v36
    %v272 = vpop.permute.xlu0 %271
    %275 = vset.pattern.permute.xlu0 0
    %276 = vperm.xlu0 %275, %v37
    %v277 = vpop.permute.xlu0 %276
    %280 = vset.pattern.permute.xlu0 0
    %281 = vperm.xlu0 %280, %v38
    %v282 = vpop.permute.xlu0 %281
    %v284 = vmul.f32 %v248, %v257
    %v285 = vmul.f32 %v249, %v262
    %v286 = vmul.f32 %v250, %v267
    %v287 = vmul.f32 %v251, %v272
    %v288 = vmul.f32 %v252, %v277
    %v289 = vmul.f32 %v253, %v282
    %290 = vst.msk [vmem:[#allocation2 + $0x8] sm:$0xff] %vm39, %v284
    %291 = vst.msk [vmem:[#allocation2 + $0x10] sm:$0xff] %vm39, %v285
    %292 = vst.msk [vmem:[#allocation2 + $0x18] sm:$0xff] %vm39, %v286
    %293 = vst.msk [vmem:[#allocation2 + $0x20] sm:$0xff] %vm39, %v287
    %294 = vst.msk [vmem:[#allocation2 + $0x28] sm:$0xff] %vm39, %v288
    %295 = vst.msk [vmem:[#allocation2 + $0x30] sm:$0xff] %vm39, %v289
    %v296 = vld [vmem:[%s5] sm:$0xff]
    %v297 = vld [vmem:[%s5 + $0x8] sm:$0xff]
    %v298 = vld [vmem:[%s5 + $0x10] sm:$0xff]
    %v299 = vld [vmem:[%s5 + $0x18] sm:$0xff]
    %v300 = vld [vmem:[%s5 + $0x20] sm:$0xff]
    %v301 = vld [vmem:[%s5 + $0x28] sm:$0xff]
    %v302 = vld [vmem:[%s5 + $0x30] sm:$0xff]
    %v303 = vld [vmem:[%s5 + $0x38] sm:$0xff]
    %v304 = vld [vmem:[%s5 + $0x40] sm:$0xff]
    %v305 = vld [vmem:[%s5 + $0x48] sm:$0xff]
    %v306 = vld [vmem:[%s5 + $0x50] sm:$0xff]
    %v307 = vld [vmem:[%s5 + $0x58] sm:$0xff]
    %v308 = vld [vmem:[%s6] sm:$0x1]
    %v309 = vld [vmem:[#allocation2 + $0x7] sm:$0xff]
    %v310 = vld [vmem:[#allocation2 + $0xf] sm:$0xff]
    %v311 = vld [vmem:[#allocation2 + $0x17] sm:$0xff]
    %v312 = vld [vmem:[#allocation2 + $0x1f] sm:$0xff]
    %v313 = vld [vmem:[#allocation2 + $0x27] sm:$0xff]
    %v314 = vld [vmem:[#allocation2 + $0x2f] sm:$0xff]
    %v315 = vld [vmem:[#allocation2 + $0x8] sm:$0xff]
    %v316 = vld [vmem:[#allocation2 + $0x10] sm:$0xff]
    %v317 = vld [vmem:[#allocation2 + $0x18] sm:$0xff]
    %v318 = vld [vmem:[#allocation2 + $0x20] sm:$0xff]
    %v319 = vld [vmem:[#allocation2 + $0x28] sm:$0xff]
    %v320 = vld [vmem:[#allocation2 + $0x30] sm:$0xff]
    %v321 = vld [vmem:[#allocation2 + $0x9] sm:$0xff]
    %v322 = vld [vmem:[#allocation2 + $0x11] sm:$0xff]
    %v323 = vld [vmem:[#allocation2 + $0x19] sm:$0xff]
    %v324 = vld [vmem:[#allocation2 + $0x21] sm:$0xff]
    %v325 = vld [vmem:[#allocation2 + $0x29] sm:$0xff]
    %v326 = vld [vmem:[#allocation2 + $0x31] sm:$0xff]
    %333 = vrot.lane.b32.xlu0 %v315, 32
    %v334 = vpop.permute.xlu0 %333
    %335 = vrot.lane.b32.xlu0 %v316, 32
    %v336 = vpop.permute.xlu0 %335
    %337 = vrot.lane.b32.xlu0 %v317, 32
    %v338 = vpop.permute.xlu0 %337
    %339 = vrot.lane.b32.xlu0 %v318, 32
    %v340 = vpop.permute.xlu0 %339
    %341 = vrot.lane.b32.xlu0 %v319, 32
    %v342 = vpop.permute.xlu0 %341
    %343 = vrot.lane.b32.xlu0 %v320, 32
    %v344 = vpop.permute.xlu0 %343
    %357 = vrot.lane.b32.xlu0 %v321, 64
    %v358 = vpop.permute.xlu0 %357
    %359 = vrot.lane.b32.xlu0 %v322, 64
    %v360 = vpop.permute.xlu0 %359
    %361 = vrot.lane.b32.xlu0 %v323, 64
    %v362 = vpop.permute.xlu0 %361
    %363 = vrot.lane.b32.xlu0 %v324, 64
    %v364 = vpop.permute.xlu0 %363
    %365 = vrot.lane.b32.xlu0 %v325, 64
    %v366 = vpop.permute.xlu0 %365
    %367 = vrot.lane.b32.xlu0 %v326, 64
    %v368 = vpop.permute.xlu0 %367
    %v375 = vsel %vm39, %v309, %v334
    %v376 = vsel %vm39, %v310, %v336
    %v377 = vsel %vm39, %v311, %v338
    %v378 = vsel %vm39, %v312, %v340
    %v379 = vsel %vm39, %v313, %v342
    %v380 = vsel %vm39, %v314, %v344
    %vm381 = vcmask 523264
    %v382 = vsel %vm381, %v375, %v358
    %v383 = vsel %vm381, %v376, %v360
    %v384 = vsel %vm381, %v377, %v362
    %v385 = vsel %vm381, %v378, %v364
    %v386 = vsel %vm381, %v379, %v366
    %v387 = vsel %vm381, %v380, %v368
    %v388 = vlaneseq
    %v389 = vshrl.u32 %v388, 7
    %v390 = vsub.s32 0, %v389
    %v391 = vrot.slane %v308, %v390
    %vm392 = vcmask 785408
    %v394 = vsel %vm392, %v382, 0
    %v397 = vsel %vm392, %v383, 0
    %v400 = vsel %vm392, %v384, 0
    %v403 = vsel %vm392, %v385, 0
    %v406 = vsel %vm392, %v386, 0
    %v409 = vsel %vm392, %v387, 0
    %411 = vmatprep.subr.mxu0 0.0
    %412 = vmatpush1.msra.mxu0 0.0
    %413 = vmatprep.subr.mxu0 0.0
    %414 = vmatpush1.msra.mxu0 0.0
    %415 = vmatprep.subr.mxu0 0.0
    %416 = vmatpush1.msra.mxu0 0.0
    %417 = vmatprep.subr.mxu0 0.0
    %418 = vmatpush1.msra.mxu0 0.0
    %419 = vmatprep.subr.mxu0 0.0
    %420 = vmatpush1.msra.mxu0 %v307
    %421 = vmatprep.subr.mxu0 0.0
    %422 = vmatpush1.msra.mxu0 %v306
    %423 = vmatprep.subr.mxu0 0.0
    %424 = vmatpush1.msra.mxu0 %v305
    %425 = vmatprep.subr.mxu0 0.0
    %426 = vmatpush1.msra.mxu0 %v304
    %427 = vmatprep.subr.mxu0 0.0
    %428 = vmatpush1.msra.mxu0 %v303
    %429 = vmatprep.subr.mxu0 0.0
    %430 = vmatpush1.msra.mxu0 %v302
    %431 = vmatprep.subr.mxu0 0.0
    %432 = vmatpush1.msra.mxu0 %v301
    %433 = vmatprep.subr.mxu0 0.0
    %434 = vmatpush1.msra.mxu0 %v300
    %435 = vmatprep.subr.mxu0 0.0
    %436 = vmatpush1.msra.mxu0 %v299
    %437 = vmatprep.subr.mxu0 0.0
    %438 = vmatpush1.msra.mxu0 %v298
    %439 = vmatprep.subr.mxu0 0.0
    %440 = vmatpush1.msra.mxu0 %v297
    %441 = vmatprep.subr.mxu0 0.0
    %442 = vmatpush1.msra.mxu0 %v296
    %443 = vmatprep.subr.mxu0 0.0
    %444 = vmatpush2.msra.mxu0 0.0
    %445 = vmatprep.subr.mxu0 0.0
    %446 = vmatpush2.msra.mxu0 0.0
    %447 = vmatprep.subr.mxu0 0.0
    %448 = vmatpush2.msra.mxu0 0.0
    %449 = vmatprep.subr.mxu0 0.0
    %450 = vmatpush2.msra.mxu0 0.0
    %451 = vmatprep.subr.mxu0 0.0
    %452 = vmatpush2.msra.mxu0 0.0
    %453 = vmatprep.subr.mxu0 0.0
    %454 = vmatpush2.msra.mxu0 0.0
    %455 = vmatprep.subr.mxu0 0.0
    %456 = vmatpush2.msra.mxu0 0.0
    %457 = vmatprep.subr.mxu0 0.0
    %458 = vmatpush2.msra.mxu0 0.0
    %459 = vmatprep.subr.mxu0 0.0
    %460 = vmatpush2.msra.mxu0 0.0
    %461 = vmatprep.subr.mxu0 0.0
    %462 = vmatpush2.msra.mxu0 0.0
    %463 = vmatprep.subr.mxu0 0.0
    %464 = vmatpush2.msra.mxu0 0.0
    %465 = vmatprep.subr.mxu0 0.0
    %466 = vmatpush2.msra.mxu0 0.0
    %467 = vmatprep.subr.mxu0 0.0
    %468 = vmatpush2.msra.mxu0 0.0
    %469 = vmatprep.subr.mxu0 0.0
    %470 = vmatpush2.msra.mxu0 0.0
    %471 = vmatprep.subr.mxu0 0.0
    %472 = vmatpush2.msra.mxu0 0.0
    %473 = vmatprep.subr.mxu0 0.0
    %474 = vmatpush2.msra.mxu0 0.0
    %475 = vmatprep.mubr.f32.mxu0 0.0
    %476 = vmatmul.mubr.f32.gmra.mxu0 %v394
    %v477 = vpop.f32.mrf.mxu0
    %v478 = vadd.f32 %v391, %v477
    %v479 = vpop.f32.mrf.mxu0
    %480 = vmatprep.mubr.f32.mxu0 0.0
    %481 = vmatmul.mubr.f32.gmra.mxu0 %v397
    %v482 = vpop.f32.mrf.mxu0
    %v483 = vadd.f32 %v391, %v482
    %v484 = vpop.f32.mrf.mxu0
    %485 = vmatprep.mubr.f32.mxu0 0.0
    %486 = vmatmul.mubr.f32.gmra.mxu0 %v400
    %v487 = vpop.f32.mrf.mxu0
    %v488 = vadd.f32 %v391, %v487
    %v489 = vpop.f32.mrf.mxu0
    %490 = vmatprep.mubr.f32.mxu0 0.0
    %491 = vmatmul.mubr.f32.gmra.mxu0 %v403
    %v492 = vpop.f32.mrf.mxu0
    %v493 = vadd.f32 %v391, %v492
    %v494 = vpop.f32.mrf.mxu0
    %495 = vmatprep.mubr.f32.mxu0 0.0
    %496 = vmatmul.mubr.f32.gmra.mxu0 %v406
    %v497 = vpop.f32.mrf.mxu0
    %v498 = vadd.f32 %v391, %v497
    %v499 = vpop.f32.mrf.mxu0
    %500 = vmatprep.mubr.f32.mxu0 0.0
    %501 = vmatmul.mubr.f32.gmra.mxu0 %v409
    %v502 = vpop.f32.mrf.mxu0
    %v503 = vadd.f32 %v391, %v502
    %v504 = vpop.f32.mrf.mxu0
    %505 = vdwg.mxu0
    %v506 = vmax.f32 %v478, 0.0
    %v507 = vmax.f32 %v483, 0.0
    %v508 = vmax.f32 %v488, 0.0
    %v509 = vmax.f32 %v493, 0.0
    %v510 = vmax.f32 %v498, 0.0
    %v511 = vmax.f32 %v503, 0.0
    %518 = vrot.lane.b32.xlu0 %v220, 96
    %v519 = vpop.permute.xlu0 %518
    %520 = vrot.lane.b32.xlu0 %v225, 96
    %v521 = vpop.permute.xlu0 %520
    %522 = vrot.lane.b32.xlu0 %v230, 96
    %v523 = vpop.permute.xlu0 %522
    %524 = vrot.lane.b32.xlu0 %v235, 96
    %v525 = vpop.permute.xlu0 %524
    %526 = vrot.lane.b32.xlu0 %v240, 96
    %v527 = vpop.permute.xlu0 %526
    %528 = vrot.lane.b32.xlu0 %v245, 96
    %v529 = vpop.permute.xlu0 %528
    %v536 = vadd.f32 %v506, %v519
    %v537 = vadd.f32 %v507, %v521
    %v538 = vadd.f32 %v508, %v523
    %v539 = vadd.f32 %v509, %v525
    %v540 = vadd.f32 %v510, %v527
    %v541 = vadd.f32 %v511, %v529
    %v542 = vmax.f32 %v536, 0.0
    %v543 = vmax.f32 %v537, 0.0
    %v544 = vmax.f32 %v538, 0.0
    %v545 = vmax.f32 %v539, 0.0
    %v546 = vmax.f32 %v540, 0.0
    %v547 = vmax.f32 %v541, 0.0
    %v548 = vmul.f32 %v542, %v257
    %v549 = vmul.f32 %v543, %v262
    %v550 = vmul.f32 %v544, %v267
    %v551 = vmul.f32 %v545, %v272
    %v552 = vmul.f32 %v546, %v277
    %v553 = vmul.f32 %v547, %v282
    %554 = vst.msk [vmem:[#allocation2 + $0x8] sm:$0xff] %vm39, %v548
    %555 = vst.msk [vmem:[#allocation2 + $0x10] sm:$0xff] %vm39, %v549
    %556 = vst.msk [vmem:[#allocation2 + $0x18] sm:$0xff] %vm39, %v550
    %557 = vst.msk [vmem:[#allocation2 + $0x20] sm:$0xff] %vm39, %v551
    %558 = vst.msk [vmem:[#allocation2 + $0x28] sm:$0xff] %vm39, %v552
    %559 = vst.msk [vmem:[#allocation2 + $0x30] sm:$0xff] %vm39, %v553
    %s560 = scalar_lea.vmem %s5, 96
    %v561 = vld [vmem:[%s560] sm:$0xff]
    %v562 = vld [vmem:[%s560 + $0x8] sm:$0xff]
    %v563 = vld [vmem:[%s560 + $0x10] sm:$0xff]
    %v564 = vld [vmem:[%s560 + $0x18] sm:$0xff]
    %v565 = vld [vmem:[%s560 + $0x20] sm:$0xff]
    %v566 = vld [vmem:[%s560 + $0x28] sm:$0xff]
    %v567 = vld [vmem:[%s560 + $0x30] sm:$0xff]
    %v568 = vld [vmem:[%s560 + $0x38] sm:$0xff]
    %v569 = vld [vmem:[%s560 + $0x40] sm:$0xff]
    %v570 = vld [vmem:[%s560 + $0x48] sm:$0xff]
    %v571 = vld [vmem:[%s560 + $0x50] sm:$0xff]
    %v572 = vld [vmem:[%s560 + $0x58] sm:$0xff]
    %v573 = vld [vmem:[%s6 + $0x1] sm:$0x1]
    %v574 = vld [vmem:[#allocation2 + $0x6] sm:$0xff]
    %v575 = vld [vmem:[#allocation2 + $0xe] sm:$0xff]
    %v576 = vld [vmem:[#allocation2 + $0x16] sm:$0xff]
    %v577 = vld [vmem:[#allocation2 + $0x1e] sm:$0xff]
    %v578 = vld [vmem:[#allocation2 + $0x26] sm:$0xff]
    %v579 = vld [vmem:[#allocation2 + $0x2e] sm:$0xff]
    %v580 = vld [vmem:[#allocation2 + $0x8] sm:$0xff]
    %v581 = vld [vmem:[#allocation2 + $0x10] sm:$0xff]
    %v582 = vld [vmem:[#allocation2 + $0x18] sm:$0xff]
    %v583 = vld [vmem:[#allocation2 + $0x20] sm:$0xff]
    %v584 = vld [vmem:[#allocation2 + $0x28] sm:$0xff]
    %v585 = vld [vmem:[#allocation2 + $0x30] sm:$0xff]
    %v586 = vld [vmem:[#allocation2 + $0xa] sm:$0xff]
    %v587 = vld [vmem:[#allocation2 + $0x12] sm:$0xff]
    %v588 = vld [vmem:[#allocation2 + $0x1a] sm:$0xff]
    %v589 = vld [vmem:[#allocation2 + $0x22] sm:$0xff]
    %v590 = vld [vmem:[#allocation2 + $0x2a] sm:$0xff]
    %v591 = vld [vmem:[#allocation2 + $0x32] sm:$0xff]
    %598 = vrot.lane.b32.xlu0 %v580, 32
    %v599 = vpop.permute.xlu0 %598
    %600 = vrot.lane.b32.xlu0 %v581, 32
    %v601 = vpop.permute.xlu0 %600
    %602 = vrot.lane.b32.xlu0 %v582, 32
    %v603 = vpop.permute.xlu0 %602
    %604 = vrot.lane.b32.xlu0 %v583, 32
    %v605 = vpop.permute.xlu0 %604
    %606 = vrot.lane.b32.xlu0 %v584, 32
    %v607 = vpop.permute.xlu0 %606
    %608 = vrot.lane.b32.xlu0 %v585, 32
    %v609 = vpop.permute.xlu0 %608
    %622 = vrot.lane.b32.xlu0 %v586, 64
    %v623 = vpop.permute.xlu0 %622
    %624 = vrot.lane.b32.xlu0 %v587, 64
    %v625 = vpop.permute.xlu0 %624
    %626 = vrot.lane.b32.xlu0 %v588, 64
    %v627 = vpop.permute.xlu0 %626
    %628 = vrot.lane.b32.xlu0 %v589, 64
    %v629 = vpop.permute.xlu0 %628
    %630 = vrot.lane.b32.xlu0 %v590, 64
    %v631 = vpop.permute.xlu0 %630
    %632 = vrot.lane.b32.xlu0 %v591, 64
    %v633 = vpop.permute.xlu0 %632
    %v640 = vsel %vm39, %v574, %v599
    %v641 = vsel %vm39, %v575, %v601
    %v642 = vsel %vm39, %v576, %v603
    %v643 = vsel %vm39, %v577, %v605
    %v644 = vsel %vm39, %v578, %v607
    %v645 = vsel %vm39, %v579, %v609
    %v646 = vsel %vm381, %v640, %v623
    %v647 = vsel %vm381, %v641, %v625
    %v648 = vsel %vm381, %v642, %v627
    %v649 = vsel %vm381, %v643, %v629
    %v650 = vsel %vm381, %v644, %v631
    %v651 = vsel %vm381, %v645, %v633
    %v652 = vlaneseq
    %v653 = vshrl.u32 %v652, 7
    %v654 = vsub.s32 0, %v653
    %v655 = vrot.slane %v573, %v654
    %v657 = vsel %vm392, %v646, 0
    %v660 = vsel %vm392, %v647, 0
    %v663 = vsel %vm392, %v648, 0
    %v666 = vsel %vm392, %v649, 0
    %v669 = vsel %vm392, %v650, 0
    %v672 = vsel %vm392, %v651, 0
    %674 = vmatprep.subr.mxu0 0.0
    %675 = vmatpush1.msra.mxu0 0.0
    %676 = vmatprep.subr.mxu0 0.0
    %677 = vmatpush1.msra.mxu0 0.0
    %678 = vmatprep.subr.mxu0 0.0
    %679 = vmatpush1.msra.mxu0 0.0
    %680 = vmatprep.subr.mxu0 0.0
    %681 = vmatpush1.msra.mxu0 0.0
    %682 = vmatprep.subr.mxu0 0.0
    %683 = vmatpush1.msra.mxu0 %v572
    %684 = vmatprep.subr.mxu0 0.0
    %685 = vmatpush1.msra.mxu0 %v571
    %686 = vmatprep.subr.mxu0 0.0
    %687 = vmatpush1.msra.mxu0 %v570
    %688 = vmatprep.subr.mxu0 0.0
    %689 = vmatpush1.msra.mxu0 %v569
    %690 = vmatprep.subr.mxu0 0.0
    %691 = vmatpush1.msra.mxu0 %v568
    %692 = vmatprep.subr.mxu0 0.0
    %693 = vmatpush1.msra.mxu0 %v567
    %694 = vmatprep.subr.mxu0 0.0
    %695 = vmatpush1.msra.mxu0 %v566
    %696 = vmatprep.subr.mxu0 0.0
    %697 = vmatpush1.msra.mxu0 %v565
    %698 = vmatprep.subr.mxu0 0.0
    %699 = vmatpush1.msra.mxu0 %v564
    %700 = vmatprep.subr.mxu0 0.0
    %701 = vmatpush1.msra.mxu0 %v563
    %702 = vmatprep.subr.mxu0 0.0
    %703 = vmatpush1.msra.mxu0 %v562
    %704 = vmatprep.subr.mxu0 0.0
    %705 = vmatpush1.msra.mxu0 %v561
    %706 = vmatprep.subr.mxu0 0.0
    %707 = vmatpush2.msra.mxu0 0.0
    %708 = vmatprep.subr.mxu0 0.0
    %709 = vmatpush2.msra.mxu0 0.0
    %710 = vmatprep.subr.mxu0 0.0
    %711 = vmatpush2.msra.mxu0 0.0
    %712 = vmatprep.subr.mxu0 0.0
    %713 = vmatpush2.msra.mxu0 0.0
    %714 = vmatprep.subr.mxu0 0.0
    %715 = vmatpush2.msra.mxu0 0.0
    %716 = vmatprep.subr.mxu0 0.0
    %717 = vmatpush2.msra.mxu0 0.0
    %718 = vmatprep.subr.mxu0 0.0
    %719 = vmatpush2.msra.mxu0 0.0
    %720 = vmatprep.subr.mxu0 0.0
    %721 = vmatpush2.msra.mxu0 0.0
    %722 = vmatprep.subr.mxu0 0.0
    %723 = vmatpush2.msra.mxu0 0.0
    %724 = vmatprep.subr.mxu0 0.0
    %725 = vmatpush2.msra.mxu0 0.0
    %726 = vmatprep.subr.mxu0 0.0
    %727 = vmatpush2.msra.mxu0 0.0
    %728 = vmatprep.subr.mxu0 0.0
    %729 = vmatpush2.msra.mxu0 0.0
    %730 = vmatprep.subr.mxu0 0.0
    %731 = vmatpush2.msra.mxu0 0.0
    %732 = vmatprep.subr.mxu0 0.0
    %733 = vmatpush2.msra.mxu0 0.0
    %734 = vmatprep.subr.mxu0 0.0
    %735 = vmatpush2.msra.mxu0 0.0
    %736 = vmatprep.subr.mxu0 0.0
    %737 = vmatpush2.msra.mxu0 0.0
    %738 = vmatprep.mubr.f32.mxu0 0.0
    %739 = vmatmul.mubr.f32.gmra.mxu0 %v657
    %v740 = vpop.f32.mrf.mxu0
    %v741 = vadd.f32 %v655, %v740
    %v742 = vpop.f32.mrf.mxu0
    %743 = vmatprep.mubr.f32.mxu0 0.0
    %744 = vmatmul.mubr.f32.gmra.mxu0 %v660
    %v745 = vpop.f32.mrf.mxu0
    %v746 = vadd.f32 %v655, %v745
    %v747 = vpop.f32.mrf.mxu0
    %748 = vmatprep.mubr.f32.mxu0 0.0
    %749 = vmatmul.mubr.f32.gmra.mxu0 %v663
    %v750 = vpop.f32.mrf.mxu0
    %v751 = vadd.f32 %v655, %v750
    %v752 = vpop.f32.mrf.mxu0
    %753 = vmatprep.mubr.f32.mxu0 0.0
    %754 = vmatmul.mubr.f32.gmra.mxu0 %v666
    %v755 = vpop.f32.mrf.mxu0
    %v756 = vadd.f32 %v655, %v755
    %v757 = vpop.f32.mrf.mxu0
    %758 = vmatprep.mubr.f32.mxu0 0.0
    %759 = vmatmul.mubr.f32.gmra.mxu0 %v669
    %v760 = vpop.f32.mrf.mxu0
    %v761 = vadd.f32 %v655, %v760
    %v762 = vpop.f32.mrf.mxu0
    %763 = vmatprep.mubr.f32.mxu0 0.0
    %764 = vmatmul.mubr.f32.gmra.mxu0 %v672
    %v765 = vpop.f32.mrf.mxu0
    %v766 = vadd.f32 %v655, %v765
    %v767 = vpop.f32.mrf.mxu0
    %768 = vdwg.mxu0
    %v769 = vmax.f32 %v741, 0.0
    %v770 = vmax.f32 %v746, 0.0
    %v771 = vmax.f32 %v751, 0.0
    %v772 = vmax.f32 %v756, 0.0
    %v773 = vmax.f32 %v761, 0.0
    %v774 = vmax.f32 %v766, 0.0
    %v775 = vmul.f32 %v769, %v257
    %v776 = vmul.f32 %v770, %v262
    %v777 = vmul.f32 %v771, %v267
    %v778 = vmul.f32 %v772, %v272
    %v779 = vmul.f32 %v773, %v277
    %v780 = vmul.f32 %v774, %v282
    %781 = vst.msk [vmem:[#allocation2 + $0x8] sm:$0xff] %vm39, %v775
    %782 = vst.msk [vmem:[#allocation2 + $0x10] sm:$0xff] %vm39, %v776
    %783 = vst.msk [vmem:[#allocation2 + $0x18] sm:$0xff] %vm39, %v777
    %784 = vst.msk [vmem:[#allocation2 + $0x20] sm:$0xff] %vm39, %v778
    %785 = vst.msk [vmem:[#allocation2 + $0x28] sm:$0xff] %vm39, %v779
    %786 = vst.msk [vmem:[#allocation2 + $0x30] sm:$0xff] %vm39, %v780
    %s787 = scalar_lea.vmem %s5, 192
    %v788 = vld [vmem:[%s787] sm:$0xff]
    %v789 = vld [vmem:[%s787 + $0x8] sm:$0xff]
    %v790 = vld [vmem:[%s787 + $0x10] sm:$0xff]
    %v791 = vld [vmem:[%s787 + $0x18] sm:$0xff]
    %v792 = vld [vmem:[%s787 + $0x20] sm:$0xff]
    %v793 = vld [vmem:[%s787 + $0x28] sm:$0xff]
    %v794 = vld [vmem:[%s787 + $0x30] sm:$0xff]
    %v795 = vld [vmem:[%s787 + $0x38] sm:$0xff]
    %v796 = vld [vmem:[%s787 + $0x40] sm:$0xff]
    %v797 = vld [vmem:[%s787 + $0x48] sm:$0xff]
    %v798 = vld [vmem:[%s787 + $0x50] sm:$0xff]
    %v799 = vld [vmem:[%s787 + $0x58] sm:$0xff]
    %v800 = vld [vmem:[%s6 + $0x2] sm:$0x1]
    %v801 = vld [vmem:[#allocation2 + $0x6] sm:$0xff]
    %v802 = vld [vmem:[#allocation2 + $0xe] sm:$0xff]
    %v803 = vld [vmem:[#allocation2 + $0x16] sm:$0xff]
    %v804 = vld [vmem:[#allocation2 + $0x1e] sm:$0xff]
    %v805 = vld [vmem:[#allocation2 + $0x26] sm:$0xff]
    %v806 = vld [vmem:[#allocation2 + $0x2e] sm:$0xff]
    %v807 = vld [vmem:[#allocation2 + $0x8] sm:$0xff]
    %v808 = vld [vmem:[#allocation2 + $0x10] sm:$0xff]
    %v809 = vld [vmem:[#allocation2 + $0x18] sm:$0xff]
    %v810 = vld [vmem:[#allocation2 + $0x20] sm:$0xff]
    %v811 = vld [vmem:[#allocation2 + $0x28] sm:$0xff]
    %v812 = vld [vmem:[#allocation2 + $0x30] sm:$0xff]
    %v813 = vld [vmem:[#allocation2 + $0xa] sm:$0xff]
    %v814 = vld [vmem:[#allocation2 + $0x12] sm:$0xff]
    %v815 = vld [vmem:[#allocation2 + $0x1a] sm:$0xff]
    %v816 = vld [vmem:[#allocation2 + $0x22] sm:$0xff]
    %v817 = vld [vmem:[#allocation2 + $0x2a] sm:$0xff]
    %v818 = vld [vmem:[#allocation2 + $0x32] sm:$0xff]
    %825 = vrot.lane.b32.xlu0 %v807, 32
    %v826 = vpop.permute.xlu0 %825
    %827 = vrot.lane.b32.xlu0 %v808, 32
    %v828 = vpop.permute.xlu0 %827
    %829 = vrot.lane.b32.xlu0 %v809, 32
    %v830 = vpop.permute.xlu0 %829
    %831 = vrot.lane.b32.xlu0 %v810, 32
    %v832 = vpop.permute.xlu0 %831
    %833 = vrot.lane.b32.xlu0 %v811, 32
    %v834 = vpop.permute.xlu0 %833
    %835 = vrot.lane.b32.xlu0 %v812, 32
    %v836 = vpop.permute.xlu0 %835
    %849 = vrot.lane.b32.xlu0 %v813, 64
    %v850 = vpop.permute.xlu0 %849
    %851 = vrot.lane.b32.xlu0 %v814, 64
    %v852 = vpop.permute.xlu0 %851
    %853 = vrot.lane.b32.xlu0 %v815, 64
    %v854 = vpop.permute.xlu0 %853
    %855 = vrot.lane.b32.xlu0 %v816, 64
    %v856 = vpop.permute.xlu0 %855
    %857 = vrot.lane.b32.xlu0 %v817, 64
    %v858 = vpop.permute.xlu0 %857
    %859 = vrot.lane.b32.xlu0 %v818, 64
    %v860 = vpop.permute.xlu0 %859
    %v867 = vsel %vm39, %v801, %v826
    %v868 = vsel %vm39, %v802, %v828
    %v869 = vsel %vm39, %v803, %v830
    %v870 = vsel %vm39, %v804, %v832
    %v871 = vsel %vm39, %v805, %v834
    %v872 = vsel %vm39, %v806, %v836
    %v873 = vsel %vm381, %v867, %v850
    %v874 = vsel %vm381, %v868, %v852
    %v875 = vsel %vm381, %v869, %v854
    %v876 = vsel %vm381, %v870, %v856
    %v877 = vsel %vm381, %v871, %v858
    %v878 = vsel %vm381, %v872, %v860
    %v879 = vlaneseq
    %v880 = vshrl.u32 %v879, 7
    %v881 = vsub.s32 0, %v880
    %v882 = vrot.slane %v800, %v881
    %v884 = vsel %vm392, %v873, 0
    %v887 = vsel %vm392, %v874, 0
    %v890 = vsel %vm392, %v875, 0
    %v893 = vsel %vm392, %v876, 0
    %v896 = vsel %vm392, %v877, 0
    %v899 = vsel %vm392, %v878, 0
    %901 = vmatprep.subr.mxu0 0.0
    %902 = vmatpush1.msra.mxu0 0.0
    %903 = vmatprep.subr.mxu0 0.0
    %904 = vmatpush1.msra.mxu0 0.0
    %905 = vmatprep.subr.mxu0 0.0
    %906 = vmatpush1.msra.mxu0 0.0
    %907 = vmatprep.subr.mxu0 0.0
    %908 = vmatpush1.msra.mxu0 0.0
    %909 = vmatprep.subr.mxu0 0.0
    %910 = vmatpush1.msra.mxu0 %v799
    %911 = vmatprep.subr.mxu0 0.0
    %912 = vmatpush1.msra.mxu0 %v798
    %913 = vmatprep.subr.mxu0 0.0
    %914 = vmatpush1.msra.mxu0 %v797
    %915 = vmatprep.subr.mxu0 0.0
    %916 = vmatpush1.msra.mxu0 %v796
    %917 = vmatprep.subr.mxu0 0.0
    %918 = vmatpush1.msra.mxu0 %v795
    %919 = vmatprep.subr.mxu0 0.0
    %920 = vmatpush1.msra.mxu0 %v794
    %921 = vmatprep.subr.mxu0 0.0
    %922 = vmatpush1.msra.mxu0 %v793
    %923 = vmatprep.subr.mxu0 0.0
    %924 = vmatpush1.msra.mxu0 %v792
    %925 = vmatprep.subr.mxu0 0.0
    %926 = vmatpush1.msra.mxu0 %v791
    %927 = vmatprep.subr.mxu0 0.0
    %928 = vmatpush1.msra.mxu0 %v790
    %929 = vmatprep.subr.mxu0 0.0
    %930 = vmatpush1.msra.mxu0 %v789
    %931 = vmatprep.subr.mxu0 0.0
    %932 = vmatpush1.msra.mxu0 %v788
    %933 = vmatprep.subr.mxu0 0.0
    %934 = vmatpush2.msra.mxu0 0.0
    %935 = vmatprep.subr.mxu0 0.0
    %936 = vmatpush2.msra.mxu0 0.0
    %937 = vmatprep.subr.mxu0 0.0
    %938 = vmatpush2.msra.mxu0 0.0
    %939 = vmatprep.subr.mxu0 0.0
    %940 = vmatpush2.msra.mxu0 0.0
    %941 = vmatprep.subr.mxu0 0.0
    %942 = vmatpush2.msra.mxu0 0.0
    %943 = vmatprep.subr.mxu0 0.0
    %944 = vmatpush2.msra.mxu0 0.0
    %945 = vmatprep.subr.mxu0 0.0
    %946 = vmatpush2.msra.mxu0 0.0
    %947 = vmatprep.subr.mxu0 0.0
    %948 = vmatpush2.msra.mxu0 0.0
    %949 = vmatprep.subr.mxu0 0.0
    %950 = vmatpush2.msra.mxu0 0.0
    %951 = vmatprep.subr.mxu0 0.0
    %952 = vmatpush2.msra.mxu0 0.0
    %953 = vmatprep.subr.mxu0 0.0
    %954 = vmatpush2.msra.mxu0 0.0
    %955 = vmatprep.subr.mxu0 0.0
    %956 = vmatpush2.msra.mxu0 0.0
    %957 = vmatprep.subr.mxu0 0.0
    %958 = vmatpush2.msra.mxu0 0.0
    %959 = vmatprep.subr.mxu0 0.0
    %960 = vmatpush2.msra.mxu0 0.0
    %961 = vmatprep.subr.mxu0 0.0
    %962 = vmatpush2.msra.mxu0 0.0
    %963 = vmatprep.subr.mxu0 0.0
    %964 = vmatpush2.msra.mxu0 0.0
    %965 = vmatprep.mubr.f32.mxu0 0.0
    %966 = vmatmul.mubr.f32.gmra.mxu0 %v884
    %v967 = vpop.f32.mrf.mxu0
    %v968 = vadd.f32 %v882, %v967
    %v969 = vpop.f32.mrf.mxu0
    %970 = vmatprep.mubr.f32.mxu0 0.0
    %971 = vmatmul.mubr.f32.gmra.mxu0 %v887
    %v972 = vpop.f32.mrf.mxu0
    %v973 = vadd.f32 %v882, %v972
    %v974 = vpop.f32.mrf.mxu0
    %975 = vmatprep.mubr.f32.mxu0 0.0
    %976 = vmatmul.mubr.f32.gmra.mxu0 %v890
    %v977 = vpop.f32.mrf.mxu0
    %v978 = vadd.f32 %v882, %v977
    %v979 = vpop.f32.mrf.mxu0
    %980 = vmatprep.mubr.f32.mxu0 0.0
    %981 = vmatmul.mubr.f32.gmra.mxu0 %v893
    %v982 = vpop.f32.mrf.mxu0
    %v983 = vadd.f32 %v882, %v982
    %v984 = vpop.f32.mrf.mxu0
    %985 = vmatprep.mubr.f32.mxu0 0.0
    %986 = vmatmul.mubr.f32.gmra.mxu0 %v896
    %v987 = vpop.f32.mrf.mxu0
    %v988 = vadd.f32 %v882, %v987
    %v989 = vpop.f32.mrf.mxu0
    %990 = vmatprep.mubr.f32.mxu0 0.0
    %991 = vmatmul.mubr.f32.gmra.mxu0 %v899
    %v992 = vpop.f32.mrf.mxu0
    %v993 = vadd.f32 %v882, %v992
    %v994 = vpop.f32.mrf.mxu0
    %995 = vdwg.mxu0
    %v996 = vmax.f32 %v968, 0.0
    %v997 = vmax.f32 %v973, 0.0
    %v998 = vmax.f32 %v978, 0.0
    %v999 = vmax.f32 %v983, 0.0
    %v1000 = vmax.f32 %v988, 0.0
    %v1001 = vmax.f32 %v993, 0.0
    %v1002 = vadd.f32 %v996, %v548
    %v1003 = vadd.f32 %v997, %v549
    %v1004 = vadd.f32 %v998, %v550
    %v1005 = vadd.f32 %v999, %v551
    %v1006 = vadd.f32 %v1000, %v552
    %v1007 = vadd.f32 %v1001, %v553
    %v1008 = vmax.f32 %v1002, 0.0
    %v1009 = vmax.f32 %v1003, 0.0
    %v1010 = vmax.f32 %v1004, 0.0
    %v1011 = vmax.f32 %v1005, 0.0
    %v1012 = vmax.f32 %v1006, 0.0
    %v1013 = vmax.f32 %v1007, 0.0
    %v1014 = vmul.f32 %v1008, %v257
    %v1015 = vmul.f32 %v1009, %v262
    %v1016 = vmul.f32 %v1010, %v267
    %v1017 = vmul.f32 %v1011, %v272
    %v1018 = vmul.f32 %v1012, %v277
    %v1019 = vmul.f32 %v1013, %v282
    %1020 = vst.msk [vmem:[#allocation2 + $0x8] sm:$0xff] %vm39, %v1014
    %1021 = vst.msk [vmem:[#allocation2 + $0x10] sm:$0xff] %vm39, %v1015
    %1022 = vst.msk [vmem:[#allocation2 + $0x18] sm:$0xff] %vm39, %v1016
    %1023 = vst.msk [vmem:[#allocation2 + $0x20] sm:$0xff] %vm39, %v1017
    %1024 = vst.msk [vmem:[#allocation2 + $0x28] sm:$0xff] %vm39, %v1018
    %1025 = vst.msk [vmem:[#allocation2 + $0x30] sm:$0xff] %vm39, %v1019
    %s1026 = scalar_lea.vmem %s5, 288
    %v1027 = vld [vmem:[%s1026] sm:$0xff]
    %v1028 = vld [vmem:[%s1026 + $0x8] sm:$0xff]
    %v1029 = vld [vmem:[%s1026 + $0x10] sm:$0xff]
    %v1030 = vld [vmem:[%s1026 + $0x18] sm:$0xff]
    %v1031 = vld [vmem:[%s1026 + $0x20] sm:$0xff]
    %v1032 = vld [vmem:[%s1026 + $0x28] sm:$0xff]
    %v1033 = vld [vmem:[%s1026 + $0x30] sm:$0xff]
    %v1034 = vld [vmem:[%s1026 + $0x38] sm:$0xff]
    %v1035 = vld [vmem:[%s1026 + $0x40] sm:$0xff]
    %v1036 = vld [vmem:[%s1026 + $0x48] sm:$0xff]
    %v1037 = vld [vmem:[%s1026 + $0x50] sm:$0xff]
    %v1038 = vld [vmem:[%s1026 + $0x58] sm:$0xff]
    %v1039 = vld [vmem:[%s6 + $0x3] sm:$0x1]
    %v1040 = vld [vmem:[#allocation2 + $0x4] sm:$0xff]
    %v1041 = vld [vmem:[#allocation2 + $0xc] sm:$0xff]
    %v1042 = vld [vmem:[#allocation2 + $0x14] sm:$0xff]
    %v1043 = vld [vmem:[#allocation2 + $0x1c] sm:$0xff]
    %v1044 = vld [vmem:[#allocation2 + $0x24] sm:$0xff]
    %v1045 = vld [vmem:[#allocation2 + $0x2c] sm:$0xff]
    %v1046 = vld [vmem:[#allocation2 + $0x8] sm:$0xff]
    %v1047 = vld [vmem:[#allocation2 + $0x10] sm:$0xff]
    %v1048 = vld [vmem:[#allocation2 + $0x18] sm:$0xff]
    %v1049 = vld [vmem:[#allocation2 + $0x20] sm:$0xff]
    %v1050 = vld [vmem:[#allocation2 + $0x28] sm:$0xff]
    %v1051 = vld [vmem:[#allocation2 + $0x30] sm:$0xff]
    %v1052 = vld [vmem:[#allocation2 + $0x34] sm:$0xff]
    %1059 = vrot.lane.b32.xlu0 %v1046, 32
    %v1060 = vpop.permute.xlu0 %1059
    %1061 = vrot.lane.b32.xlu0 %v1047, 32
    %v1062 = vpop.permute.xlu0 %1061
    %1063 = vrot.lane.b32.xlu0 %v1048, 32
    %v1064 = vpop.permute.xlu0 %1063
    %1065 = vrot.lane.b32.xlu0 %v1049, 32
    %v1066 = vpop.permute.xlu0 %1065
    %1067 = vrot.lane.b32.xlu0 %v1050, 32
    %v1068 = vpop.permute.xlu0 %1067
    %1069 = vrot.lane.b32.xlu0 %v1051, 32
    %v1070 = vpop.permute.xlu0 %1069
    %1083 = vrot.lane.b32.xlu0 %v1041, 64
    %v1084 = vpop.permute.xlu0 %1083
    %1085 = vrot.lane.b32.xlu0 %v1042, 64
    %v1086 = vpop.permute.xlu0 %1085
    %1087 = vrot.lane.b32.xlu0 %v1043, 64
    %v1088 = vpop.permute.xlu0 %1087
    %1089 = vrot.lane.b32.xlu0 %v1044, 64
    %v1090 = vpop.permute.xlu0 %1089
    %1091 = vrot.lane.b32.xlu0 %v1045, 64
    %v1092 = vpop.permute.xlu0 %1091
    %1093 = vrot.lane.b32.xlu0 %v1052, 64
    %v1094 = vpop.permute.xlu0 %1093
    %v1101 = vsel %vm39, %v1040, %v1060
    %v1102 = vsel %vm39, %v1041, %v1062
    %v1103 = vsel %vm39, %v1042, %v1064
    %v1104 = vsel %vm39, %v1043, %v1066
    %v1105 = vsel %vm39, %v1044, %v1068
    %v1106 = vsel %vm39, %v1045, %v1070
    %v1107 = vsel %vm381, %v1101, %v1084
    %v1108 = vsel %vm381, %v1102, %v1086
    %v1109 = vsel %vm381, %v1103, %v1088
    %v1110 = vsel %vm381, %v1104, %v1090
    %v1111 = vsel %vm381, %v1105, %v1092
    %v1112 = vsel %vm381, %v1106, %v1094
    %v1113 = vlaneseq
    %v1114 = vshrl.u32 %v1113, 7
    %v1115 = vsub.s32 0, %v1114
    %v1116 = vrot.slane %v1039, %v1115
    %v1118 = vsel %vm392, %v1107, 0
    %v1121 = vsel %vm392, %v1108, 0
    %v1124 = vsel %vm392, %v1109, 0
    %v1127 = vsel %vm392, %v1110, 0
    %v1130 = vsel %vm392, %v1111, 0
    %v1133 = vsel %vm392, %v1112, 0
    %1135 = vmatprep.subr.mxu0 0.0
    %1136 = vmatpush1.msra.mxu0 0.0
    %1137 = vmatprep.subr.mxu0 0.0
    %1138 = vmatpush1.msra.mxu0 0.0
    %1139 = vmatprep.subr.mxu0 0.0
    %1140 = vmatpush1.msra.mxu0 0.0
    %1141 = vmatprep.subr.mxu0 0.0
    %1142 = vmatpush1.msra.mxu0 0.0
    %1143 = vmatprep.subr.mxu0 0.0
    %1144 = vmatpush1.msra.mxu0 %v1038
    %1145 = vmatprep.subr.mxu0 0.0
    %1146 = vmatpush1.msra.mxu0 %v1037
    %1147 = vmatprep.subr.mxu0 0.0
    %1148 = vmatpush1.msra.mxu0 %v1036
    %1149 = vmatprep.subr.mxu0 0.0
    %1150 = vmatpush1.msra.mxu0 %v1035
    %1151 = vmatprep.subr.mxu0 0.0
    %1152 = vmatpush1.msra.mxu0 %v1034
    %1153 = vmatprep.subr.mxu0 0.0
    %1154 = vmatpush1.msra.mxu0 %v1033
    %1155 = vmatprep.subr.mxu0 0.0
    %1156 = vmatpush1.msra.mxu0 %v1032
    %1157 = vmatprep.subr.mxu0 0.0
    %1158 = vmatpush1.msra.mxu0 %v1031
    %1159 = vmatprep.subr.mxu0 0.0
    %1160 = vmatpush1.msra.mxu0 %v1030
    %1161 = vmatprep.subr.mxu0 0.0
    %1162 = vmatpush1.msra.mxu0 %v1029
    %1163 = vmatprep.subr.mxu0 0.0
    %1164 = vmatpush1.msra.mxu0 %v1028
    %1165 = vmatprep.subr.mxu0 0.0
    %1166 = vmatpush1.msra.mxu0 %v1027
    %1167 = vmatprep.subr.mxu0 0.0
    %1168 = vmatpush2.msra.mxu0 0.0
    %1169 = vmatprep.subr.mxu0 0.0
    %1170 = vmatpush2.msra.mxu0 0.0
    %1171 = vmatprep.subr.mxu0 0.0
    %1172 = vmatpush2.msra.mxu0 0.0
    %1173 = vmatprep.subr.mxu0 0.0
    %1174 = vmatpush2.msra.mxu0 0.0
    %1175 = vmatprep.subr.mxu0 0.0
    %1176 = vmatpush2.msra.mxu0 0.0
    %1177 = vmatprep.subr.mxu0 0.0
    %1178 = vmatpush2.msra.mxu0 0.0
    %1179 = vmatprep.subr.mxu0 0.0
    %1180 = vmatpush2.msra.mxu0 0.0
    %1181 = vmatprep.subr.mxu0 0.0
    %1182 = vmatpush2.msra.mxu0 0.0
    %1183 = vmatprep.subr.mxu0 0.0
    %1184 = vmatpush2.msra.mxu0 0.0
    %1185 = vmatprep.subr.mxu0 0.0
    %1186 = vmatpush2.msra.mxu0 0.0
    %1187 = vmatprep.subr.mxu0 0.0
    %1188 = vmatpush2.msra.mxu0 0.0
    %1189 = vmatprep.subr.mxu0 0.0
    %1190 = vmatpush2.msra.mxu0 0.0
    %1191 = vmatprep.subr.mxu0 0.0
    %1192 = vmatpush2.msra.mxu0 0.0
    %1193 = vmatprep.subr.mxu0 0.0
    %1194 = vmatpush2.msra.mxu0 0.0
    %1195 = vmatprep.subr.mxu0 0.0
    %1196 = vmatpush2.msra.mxu0 0.0
    %1197 = vmatprep.subr.mxu0 0.0
    %1198 = vmatpush2.msra.mxu0 0.0
    %1199 = vmatprep.mubr.f32.mxu0 0.0
    %1200 = vmatmul.mubr.f32.gmra.mxu0 %v1118
    %v1201 = vpop.f32.mrf.mxu0
    %v1202 = vadd.f32 %v1116, %v1201
    %v1203 = vpop.f32.mrf.mxu0
    %1204 = vmatprep.mubr.f32.mxu0 0.0
    %1205 = vmatmul.mubr.f32.gmra.mxu0 %v1121
    %v1206 = vpop.f32.mrf.mxu0
    %v1207 = vadd.f32 %v1116, %v1206
    %v1208 = vpop.f32.mrf.mxu0
    %1209 = vmatprep.mubr.f32.mxu0 0.0
    %1210 = vmatmul.mubr.f32.gmra.mxu0 %v1124
    %v1211 = vpop.f32.mrf.mxu0
    %v1212 = vadd.f32 %v1116, %v1211
    %v1213 = vpop.f32.mrf.mxu0
    %1214 = vmatprep.mubr.f32.mxu0 0.0
    %1215 = vmatmul.mubr.f32.gmra.mxu0 %v1127
    %v1216 = vpop.f32.mrf.mxu0
    %v1217 = vadd.f32 %v1116, %v1216
    %v1218 = vpop.f32.mrf.mxu0
    %1219 = vmatprep.mubr.f32.mxu0 0.0
    %1220 = vmatmul.mubr.f32.gmra.mxu0 %v1130
    %v1221 = vpop.f32.mrf.mxu0
    %v1222 = vadd.f32 %v1116, %v1221
    %v1223 = vpop.f32.mrf.mxu0
    %1224 = vmatprep.mubr.f32.mxu0 0.0
    %1225 = vmatmul.mubr.f32.gmra.mxu0 %v1133
    %v1226 = vpop.f32.mrf.mxu0
    %v1227 = vadd.f32 %v1116, %v1226
    %v1228 = vpop.f32.mrf.mxu0
    %1229 = vdwg.mxu0
    %v1230 = vmax.f32 %v1202, 0.0
    %v1231 = vmax.f32 %v1207, 0.0
    %v1232 = vmax.f32 %v1212, 0.0
    %v1233 = vmax.f32 %v1217, 0.0
    %v1234 = vmax.f32 %v1222, 0.0
    %v1235 = vmax.f32 %v1227, 0.0
    %v1236 = vmul.f32 %v1230, %v257
    %v1237 = vmul.f32 %v1231, %v262
    %v1238 = vmul.f32 %v1232, %v267
    %v1239 = vmul.f32 %v1233, %v272
    %v1240 = vmul.f32 %v1234, %v277
    %v1241 = vmul.f32 %v1235, %v282
    %1242 = vst.msk [vmem:[#allocation2 + $0x8] sm:$0xff] %vm39, %v1236
    %1243 = vst.msk [vmem:[#allocation2 + $0x10] sm:$0xff] %vm39, %v1237
    %1244 = vst.msk [vmem:[#allocation2 + $0x18] sm:$0xff] %vm39, %v1238
    %1245 = vst.msk [vmem:[#allocation2 + $0x20] sm:$0xff] %vm39, %v1239
    %1246 = vst.msk [vmem:[#allocation2 + $0x28] sm:$0xff] %vm39, %v1240
    %1247 = vst.msk [vmem:[#allocation2 + $0x30] sm:$0xff] %vm39, %v1241
    %s1248 = scalar_lea.vmem %s5, 384
    %v1249 = vld [vmem:[%s1248] sm:$0xff]
    %v1250 = vld [vmem:[%s1248 + $0x8] sm:$0xff]
    %v1251 = vld [vmem:[%s1248 + $0x10] sm:$0xff]
    %v1252 = vld [vmem:[%s1248 + $0x18] sm:$0xff]
    %v1253 = vld [vmem:[%s1248 + $0x20] sm:$0xff]
    %v1254 = vld [vmem:[%s1248 + $0x28] sm:$0xff]
    %v1255 = vld [vmem:[%s1248 + $0x30] sm:$0xff]
    %v1256 = vld [vmem:[%s1248 + $0x38] sm:$0xff]
    %v1257 = vld [vmem:[%s1248 + $0x40] sm:$0xff]
    %v1258 = vld [vmem:[%s1248 + $0x48] sm:$0xff]
    %v1259 = vld [vmem:[%s1248 + $0x50] sm:$0xff]
    %v1260 = vld [vmem:[%s1248 + $0x58] sm:$0xff]
    %v1261 = vld [vmem:[%s6 + $0x4] sm:$0x1]
    %v1262 = vld [vmem:[#allocation2 + $0x4] sm:$0xff]
    %v1263 = vld [vmem:[#allocation2 + $0xc] sm:$0xff]
    %v1264 = vld [vmem:[#allocation2 + $0x14] sm:$0xff]
    %v1265 = vld [vmem:[#allocation2 + $0x1c] sm:$0xff]
    %v1266 = vld [vmem:[#allocation2 + $0x24] sm:$0xff]
    %v1267 = vld [vmem:[#allocation2 + $0x2c] sm:$0xff]
    %v1268 = vld [vmem:[#allocation2 + $0x8] sm:$0xff]
    %v1269 = vld [vmem:[#allocation2 + $0x10] sm:$0xff]
    %v1270 = vld [vmem:[#allocation2 + $0x18] sm:$0xff]
    %v1271 = vld [vmem:[#allocation2 + $0x20] sm:$0xff]
    %v1272 = vld [vmem:[#allocation2 + $0x28] sm:$0xff]
    %v1273 = vld [vmem:[#allocation2 + $0x30] sm:$0xff]
    %v1274 = vld [vmem:[#allocation2 + $0x34] sm:$0xff]
    %1281 = vrot.lane.b32.xlu0 %v1268, 32
    %v1282 = vpop.permute.xlu0 %1281
    %1283 = vrot.lane.b32.xlu0 %v1269, 32
    %v1284 = vpop.permute.xlu0 %1283
    %1285 = vrot.lane.b32.xlu0 %v1270, 32
    %v1286 = vpop.permute.xlu0 %1285
    %1287 = vrot.lane.b32.xlu0 %v1271, 32
    %v1288 = vpop.permute.xlu0 %1287
    %1289 = vrot.lane.b32.xlu0 %v1272, 32
    %v1290 = vpop.permute.xlu0 %1289
    %1291 = vrot.lane.b32.xlu0 %v1273, 32
    %v1292 = vpop.permute.xlu0 %1291
    %1305 = vrot.lane.b32.xlu0 %v1263, 64
    %v1306 = vpop.permute.xlu0 %1305
    %1307 = vrot.lane.b32.xlu0 %v1264, 64
    %v1308 = vpop.permute.xlu0 %1307
    %1309 = vrot.lane.b32.xlu0 %v1265, 64
    %v1310 = vpop.permute.xlu0 %1309
    %1311 = vrot.lane.b32.xlu0 %v1266, 64
    %v1312 = vpop.permute.xlu0 %1311
    %1313 = vrot.lane.b32.xlu0 %v1267, 64
    %v1314 = vpop.permute.xlu0 %1313
    %1315 = vrot.lane.b32.xlu0 %v1274, 64
    %v1316 = vpop.permute.xlu0 %1315
    %v1323 = vsel %vm39, %v1262, %v1282
    %v1324 = vsel %vm39, %v1263, %v1284
    %v1325 = vsel %vm39, %v1264, %v1286
    %v1326 = vsel %vm39, %v1265, %v1288
    %v1327 = vsel %vm39, %v1266, %v1290
    %v1328 = vsel %vm39, %v1267, %v1292
    %v1329 = vsel %vm381, %v1323, %v1306
    %v1330 = vsel %vm381, %v1324, %v1308
    %v1331 = vsel %vm381, %v1325, %v1310
    %v1332 = vsel %vm381, %v1326, %v1312
    %v1333 = vsel %vm381, %v1327, %v1314
    %v1334 = vsel %vm381, %v1328, %v1316
    %v1335 = vlaneseq
    %v1336 = vshrl.u32 %v1335, 7
    %v1337 = vsub.s32 0, %v1336
    %v1338 = vrot.slane %v1261, %v1337
    %v1340 = vsel %vm392, %v1329, 0
    %v1343 = vsel %vm392, %v1330, 0
    %v1346 = vsel %vm392, %v1331, 0
    %v1349 = vsel %vm392, %v1332, 0
    %v1352 = vsel %vm392, %v1333, 0
    %v1355 = vsel %vm392, %v1334, 0
    %1357 = vmatprep.subr.mxu0 0.0
    %1358 = vmatpush1.msra.mxu0 0.0
    %1359 = vmatprep.subr.mxu0 0.0
    %1360 = vmatpush1.msra.mxu0 0.0
    %1361 = vmatprep.subr.mxu0 0.0
    %1362 = vmatpush1.msra.mxu0 0.0
    %1363 = vmatprep.subr.mxu0 0.0
    %1364 = vmatpush1.msra.mxu0 0.0
    %1365 = vmatprep.subr.mxu0 0.0
    %1366 = vmatpush1.msra.mxu0 %v1260
    %1367 = vmatprep.subr.mxu0 0.0
    %1368 = vmatpush1.msra.mxu0 %v1259
    %1369 = vmatprep.subr.mxu0 0.0
    %1370 = vmatpush1.msra.mxu0 %v1258
    %1371 = vmatprep.subr.mxu0 0.0
    %1372 = vmatpush1.msra.mxu0 %v1257
    %1373 = vmatprep.subr.mxu0 0.0
    %1374 = vmatpush1.msra.mxu0 %v1256
    %1375 = vmatprep.subr.mxu0 0.0
    %1376 = vmatpush1.msra.mxu0 %v1255
    %1377 = vmatprep.subr.mxu0 0.0
    %1378 = vmatpush1.msra.mxu0 %v1254
    %1379 = vmatprep.subr.mxu0 0.0
    %1380 = vmatpush1.msra.mxu0 %v1253
    %1381 = vmatprep.subr.mxu0 0.0
    %1382 = vmatpush1.msra.mxu0 %v1252
    %1383 = vmatprep.subr.mxu0 0.0
    %1384 = vmatpush1.msra.mxu0 %v1251
    %1385 = vmatprep.subr.mxu0 0.0
    %1386 = vmatpush1.msra.mxu0 %v1250
    %1387 = vmatprep.subr.mxu0 0.0
    %1388 = vmatpush1.msra.mxu0 %v1249
    %1389 = vmatprep.subr.mxu0 0.0
    %1390 = vmatpush2.msra.mxu0 0.0
    %1391 = vmatprep.subr.mxu0 0.0
    %1392 = vmatpush2.msra.mxu0 0.0
    %1393 = vmatprep.subr.mxu0 0.0
    %1394 = vmatpush2.msra.mxu0 0.0
    %1395 = vmatprep.subr.mxu0 0.0
    %1396 = vmatpush2.msra.mxu0 0.0
    %1397 = vmatprep.subr.mxu0 0.0
    %1398 = vmatpush2.msra.mxu0 0.0
    %1399 = vmatprep.subr.mxu0 0.0
    %1400 = vmatpush2.msra.mxu0 0.0
    %1401 = vmatprep.subr.mxu0 0.0
    %1402 = vmatpush2.msra.mxu0 0.0
    %1403 = vmatprep.subr.mxu0 0.0
    %1404 = vmatpush2.msra.mxu0 0.0
    %1405 = vmatprep.subr.mxu0 0.0
    %1406 = vmatpush2.msra.mxu0 0.0
    %1407 = vmatprep.subr.mxu0 0.0
    %1408 = vmatpush2.msra.mxu0 0.0
    %1409 = vmatprep.subr.mxu0 0.0
    %1410 = vmatpush2.msra.mxu0 0.0
    %1411 = vmatprep.subr.mxu0 0.0
    %1412 = vmatpush2.msra.mxu0 0.0
    %1413 = vmatprep.subr.mxu0 0.0
    %1414 = vmatpush2.msra.mxu0 0.0
    %1415 = vmatprep.subr.mxu0 0.0
    %1416 = vmatpush2.msra.mxu0 0.0
    %1417 = vmatprep.subr.mxu0 0.0
    %1418 = vmatpush2.msra.mxu0 0.0
    %1419 = vmatprep.subr.mxu0 0.0
    %1420 = vmatpush2.msra.mxu0 0.0
    %1421 = vmatprep.mubr.f32.mxu0 0.0
    %1422 = vmatmul.mubr.f32.gmra.mxu0 %v1340
    %v1423 = vpop.f32.mrf.mxu0
    %v1424 = vadd.f32 %v1338, %v1423
    %v1425 = vpop.f32.mrf.mxu0
    %1426 = vmatprep.mubr.f32.mxu0 0.0
    %1427 = vmatmul.mubr.f32.gmra.mxu0 %v1343
    %v1428 = vpop.f32.mrf.mxu0
    %v1429 = vadd.f32 %v1338, %v1428
    %v1430 = vpop.f32.mrf.mxu0
    %1431 = vmatprep.mubr.f32.mxu0 0.0
    %1432 = vmatmul.mubr.f32.gmra.mxu0 %v1346
    %v1433 = vpop.f32.mrf.mxu0
    %v1434 = vadd.f32 %v1338, %v1433
    %v1435 = vpop.f32.mrf.mxu0
    %1436 = vmatprep.mubr.f32.mxu0 0.0
    %1437 = vmatmul.mubr.f32.gmra.mxu0 %v1349
    %v1438 = vpop.f32.mrf.mxu0
    %v1439 = vadd.f32 %v1338, %v1438
    %v1440 = vpop.f32.mrf.mxu0
    %1441 = vmatprep.mubr.f32.mxu0 0.0
    %1442 = vmatmul.mubr.f32.gmra.mxu0 %v1352
    %v1443 = vpop.f32.mrf.mxu0
    %v1444 = vadd.f32 %v1338, %v1443
    %v1445 = vpop.f32.mrf.mxu0
    %1446 = vmatprep.mubr.f32.mxu0 0.0
    %1447 = vmatmul.mubr.f32.gmra.mxu0 %v1355
    %v1448 = vpop.f32.mrf.mxu0
    %v1449 = vadd.f32 %v1338, %v1448
    %v1450 = vpop.f32.mrf.mxu0
    %1451 = vdwg.mxu0
    %v1452 = vmax.f32 %v1424, 0.0
    %v1453 = vmax.f32 %v1429, 0.0
    %v1454 = vmax.f32 %v1434, 0.0
    %v1455 = vmax.f32 %v1439, 0.0
    %v1456 = vmax.f32 %v1444, 0.0
    %v1457 = vmax.f32 %v1449, 0.0
    %v1458 = vadd.f32 %v1452, %v1014
    %v1459 = vadd.f32 %v1453, %v1015
    %v1460 = vadd.f32 %v1454, %v1016
    %v1461 = vadd.f32 %v1455, %v1017
    %v1462 = vadd.f32 %v1456, %v1018
    %v1463 = vadd.f32 %v1457, %v1019
    %v1464 = vmax.f32 %v1458, 0.0
    %v1465 = vmax.f32 %v1459, 0.0
    %v1466 = vmax.f32 %v1460, 0.0
    %v1467 = vmax.f32 %v1461, 0.0
    %v1468 = vmax.f32 %v1462, 0.0
    %v1469 = vmax.f32 %v1463, 0.0
    %v1470 = vld [vmem:[%s2] sm:$0x3]
    %vm1471 = vcmask 392192
    %v1473 = vsel %vm1471, %v1470, 0
    %1475 = vmatprep.subr.mxu0 0.0
    %1476 = vmatpush1.msra.mxu0 0.0
    %1477 = vmatprep.subr.mxu0 0.0
    %1478 = vmatpush1.msra.mxu0 0.0
    %1479 = vmatprep.subr.mxu0 0.0
    %1480 = vmatpush1.msra.mxu0 0.0
    %1481 = vmatprep.subr.mxu0 0.0
    %1482 = vmatpush1.msra.mxu0 0.0
    %1483 = vmatprep.subr.mxu0 0.0
    %1484 = vmatpush1.msra.mxu0 0.0
    %1485 = vmatprep.subr.mxu0 0.0
    %1486 = vmatpush1.msra.mxu0 0.0
    %1487 = vmatprep.subr.mxu0 0.0
    %1488 = vmatpush1.msra.mxu0 0.0
    %1489 = vmatprep.subr.mxu0 0.0
    %1490 = vmatpush1.msra.mxu0 0.0
    %1491 = vmatprep.subr.mxu0 0.0
    %1492 = vmatpush1.msra.mxu0 0.0
    %1493 = vmatprep.subr.mxu0 0.0
    %1494 = vmatpush1.msra.mxu0 0.0
    %1495 = vmatprep.subr.mxu0 0.0
    %1496 = vmatpush1.msra.mxu0 %v1469
    %1497 = vmatprep.subr.mxu0 0.0
    %1498 = vmatpush1.msra.mxu0 %v1468
    %1499 = vmatprep.subr.mxu0 0.0
    %1500 = vmatpush1.msra.mxu0 %v1467
    %1501 = vmatprep.subr.mxu0 0.0
    %1502 = vmatpush1.msra.mxu0 %v1466
    %1503 = vmatprep.subr.mxu0 0.0
    %1504 = vmatpush1.msra.mxu0 %v1465
    %1505 = vmatprep.subr.mxu0 0.0
    %1506 = vmatpush1.msra.mxu0 %v1464
    %1507 = vmatprep.subr.mxu0 0.0
    %1508 = vmatpush2.msra.mxu0 0.0
    %1509 = vmatprep.subr.mxu0 0.0
    %1510 = vmatpush2.msra.mxu0 0.0
    %1511 = vmatprep.subr.mxu0 0.0
    %1512 = vmatpush2.msra.mxu0 0.0
    %1513 = vmatprep.subr.mxu0 0.0
    %1514 = vmatpush2.msra.mxu0 0.0
    %1515 = vmatprep.subr.mxu0 0.0
    %1516 = vmatpush2.msra.mxu0 0.0
    %1517 = vmatprep.subr.mxu0 0.0
    %1518 = vmatpush2.msra.mxu0 0.0
    %1519 = vmatprep.subr.mxu0 0.0
    %1520 = vmatpush2.msra.mxu0 0.0
    %1521 = vmatprep.subr.mxu0 0.0
    %1522 = vmatpush2.msra.mxu0 0.0
    %1523 = vmatprep.subr.mxu0 0.0
    %1524 = vmatpush2.msra.mxu0 0.0
    %1525 = vmatprep.subr.mxu0 0.0
    %1526 = vmatpush2.msra.mxu0 0.0
    %1527 = vmatprep.subr.mxu0 0.0
    %1528 = vmatpush2.msra.mxu0 0.0
    %1529 = vmatprep.subr.mxu0 0.0
    %1530 = vmatpush2.msra.mxu0 0.0
    %1531 = vmatprep.subr.mxu0 0.0
    %1532 = vmatpush2.msra.mxu0 0.0
    %1533 = vmatprep.subr.mxu0 0.0
    %1534 = vmatpush2.msra.mxu0 0.0
    %1535 = vmatprep.subr.mxu0 0.0
    %1536 = vmatpush2.msra.mxu0 0.0
    %1537 = vmatprep.subr.mxu0 0.0
    %1538 = vmatpush2.msra.mxu0 0.0
    %1539 = vmatprep.mubr.f32.mxu0 0.0
    %1540 = vmatmul.mubr.f32.gmra.mxu0 %v1473
    %v1541 = vpop.f32.mrf.mxu0
    %v1542 = vadd.f32 0.0, %v1541
    %v1543 = vpop.f32.mrf.mxu0
    %1544 = vdwg.mxu0
    %v1545 = vld [vmem:[%s7] sm:$0xff]
    %v1546 = vld [vmem:[%s7 + $0x8] sm:$0xff]
    %v1547 = vld [vmem:[%s7 + $0x10] sm:$0xff]
    %v1548 = vld [vmem:[%s7 + $0x18] sm:$0xff]
    %v1549 = vld [vmem:[%s8] sm:$0x1]
    %v1551 = vlaneseq
    %v1552 = vshrl.u32 %v1551, 7
    %v1553 = vsub.s32 0, %v1552
    %v1554 = vrot.slane %v1549, %v1553
    %v1557 = vsel %vm39, %v1542, 0
    %1559 = vmatprep.subr.mxu0 0.0
    %1560 = vmatpush1.msra.mxu0 0.0
    %1561 = vmatprep.subr.mxu0 0.0
    %1562 = vmatpush1.msra.mxu0 0.0
    %1563 = vmatprep.subr.mxu0 0.0
    %1564 = vmatpush1.msra.mxu0 0.0
    %1565 = vmatprep.subr.mxu0 0.0
    %1566 = vmatpush1.msra.mxu0 0.0
    %1567 = vmatprep.subr.mxu0 0.0
    %1568 = vmatpush1.msra.mxu0 0.0
    %1569 = vmatprep.subr.mxu0 0.0
    %1570 = vmatpush1.msra.mxu0 0.0
    %1571 = vmatprep.subr.mxu0 0.0
    %1572 = vmatpush1.msra.mxu0 0.0
    %1573 = vmatprep.subr.mxu0 0.0
    %1574 = vmatpush1.msra.mxu0 0.0
    %1575 = vmatprep.subr.mxu0 0.0
    %1576 = vmatpush1.msra.mxu0 0.0
    %1577 = vmatprep.subr.mxu0 0.0
    %1578 = vmatpush1.msra.mxu0 0.0
    %1579 = vmatprep.subr.mxu0 0.0
    %1580 = vmatpush1.msra.mxu0 0.0
    %1581 = vmatprep.subr.mxu0 0.0
    %1582 = vmatpush1.msra.mxu0 0.0
    %1583 = vmatprep.subr.mxu0 0.0
    %1584 = vmatpush1.msra.mxu0 %v1548
    %1585 = vmatprep.subr.mxu0 0.0
    %1586 = vmatpush1.msra.mxu0 %v1547
    %1587 = vmatprep.subr.mxu0 0.0
    %1588 = vmatpush1.msra.mxu0 %v1546
    %1589 = vmatprep.subr.mxu0 0.0
    %1590 = vmatpush1.msra.mxu0 %v1545
    %1591 = vmatprep.subr.mxu0 0.0
    %1592 = vmatpush2.msra.mxu0 0.0
    %1593 = vmatprep.subr.mxu0 0.0
    %1594 = vmatpush2.msra.mxu0 0.0
    %1595 = vmatprep.subr.mxu0 0.0
    %1596 = vmatpush2.msra.mxu0 0.0
    %1597 = vmatprep.subr.mxu0 0.0
    %1598 = vmatpush2.msra.mxu0 0.0
    %1599 = vmatprep.subr.mxu0 0.0
    %1600 = vmatpush2.msra.mxu0 0.0
    %1601 = vmatprep.subr.mxu0 0.0
    %1602 = vmatpush2.msra.mxu0 0.0
    %1603 = vmatprep.subr.mxu0 0.0
    %1604 = vmatpush2.msra.mxu0 0.0
    %1605 = vmatprep.subr.mxu0 0.0
    %1606 = vmatpush2.msra.mxu0 0.0
    %1607 = vmatprep.subr.mxu0 0.0
    %1608 = vmatpush2.msra.mxu0 0.0
    %1609 = vmatprep.subr.mxu0 0.0
    %1610 = vmatpush2.msra.mxu0 0.0
    %1611 = vmatprep.subr.mxu0 0.0
    %1612 = vmatpush2.msra.mxu0 0.0
    %1613 = vmatprep.subr.mxu0 0.0
    %1614 = vmatpush2.msra.mxu0 0.0
    %1615 = vmatprep.subr.mxu0 0.0
    %1616 = vmatpush2.msra.mxu0 0.0
    %1617 = vmatprep.subr.mxu0 0.0
    %1618 = vmatpush2.msra.mxu0 0.0
    %1619 = vmatprep.subr.mxu0 0.0
    %1620 = vmatpush2.msra.mxu0 0.0
    %1621 = vmatprep.subr.mxu0 0.0
    %1622 = vmatpush2.msra.mxu0 0.0
    %1623 = vmatprep.mubr.f32.mxu0 0.0
    %1624 = vmatmul.mubr.f32.gmra.mxu0 %v1557
    %v1625 = vpop.f32.mrf.mxu0
    %v1626 = vadd.f32 %v1554, %v1625
    %v1627 = vpop.f32.mrf.mxu0
    %1628 = vdwg.mxu0
    %vm1629 = vcmask 25600
    %1630 = vst.msk [vmem:[#allocation3] sm:$0x3] %vm1629, %v1626
    // Predicated region
    $region38: #{tpu_custom_call.1} parent=1 // pred_check
      _
    $region39: #{tpu_custom_call.1} parent=1 // pred_check_branch
      %1632 = sbr.rel (0) target = $region41
    $region40: #{tpu_custom_call.1} parent=1 // pred_region
      %s1634 = ssub.s32 32, 32
      %1635 = vsyncadd [#allocation4], %s1634
      %s1637 = sshll.u32 [#allocation3], 4
      %s1638 = int_to_ptr.vmem [resolvable:$true] %s1637
      %1640 = dma.vmem_to_hbm [thread:$0]  %s1638, 32, %s9, [#allocation4]
    $region41: #{tpu_custom_call.1} parent=1 // pred_fallthru
      _
    // Predicated region
    $region42: #{tpu_custom_call.1} parent=1 // pred_check
      _
    $region43: #{tpu_custom_call.1} parent=1 // pred_check_branch
      %1642 = sbr.rel (0) target = $region45
    $region44: #{tpu_custom_call.1} parent=1 // pred_region
      %1643 = dma.done [#allocation4], 32
    $region45: #{tpu_custom_call.1} parent=1 // pred_fallthru
      _
    %1644 = vsyncpa [#allocation4], 1

</llo_original>
